<compile_context>
chip_gen: v7x
topology: tpu7x:2x2x1
jax: 0.10.0
libtpu: 0.0.40
codegen_flags: <defaults>
</compile_context>

<pallas_src>
import functools

import jax
import jax.numpy as jnp
from jax.experimental import pallas as pl
from jax.experimental.pallas import tpu as pltpu

BN_EPS = 1e-5


def _largest_tile(dim, pref, quantum):
    """Largest t <= pref with dim % t == 0 and (t % quantum == 0 or t == dim)."""
    if dim <= pref:
        return dim
    t = (pref // quantum) * quantum
    while t >= quantum:
        if dim % t == 0:
            return t
        t -= quantum
    # TODO(synk): ragged dims with no 128-multiple divisor fall back to a
    # full-extent block; pad to a 128 multiple for very large ragged H*W/C_in.
    return dim


def _conv_stats_kernel(wt_ref, x_ref, bias_ref, y_ref, sum_ref, sq_ref):
    """grid = (n, hw_tile, k); k (input-channel reduction) innermost."""
    k = pl.program_id(2)

    @pl.when(k == 0)
    def _():
        # Seed the resident f32 accumulator with the conv bias (broadcast over
        # the lane/HW dim) so the stored intermediate is the true conv output.
        y_ref[0] = jnp.broadcast_to(bias_ref[...], y_ref.shape[1:])

    # (C_out, tk) @ (tk, thw) -> (C_out, thw); bf16 MXU inputs, f32
    # accumulation directly into the resident f32 output block.
    y_ref[0] += jnp.dot(
        wt_ref[...], x_ref[0], preferred_element_type=jnp.float32
    )

    @pl.when(k == pl.num_programs(2) - 1)
    def _():
        y = y_ref[0]                                           # (C_out, thw) f32
        sum_ref[0, 0] = jnp.sum(y, axis=1, keepdims=True)      # (C_out, 1)
        sq_ref[0, 0] = jnp.sum(y * y, axis=1, keepdims=True)   # (C_out, 1)


def _bn_relu_kernel(y_ref, scale_ref, shift_ref, o_ref):
    """Elementwise normalize + ReLU, tiled over (n, hw_tile)."""
    yn = y_ref[0] * scale_ref[...] + shift_ref[...]            # (C_out, thw)
    o_ref[0] = jnp.maximum(yn, 0.0).astype(o_ref.dtype)


@functools.partial(jax.jit, static_argnames=("tk_pref", "thw_pref"))
def initial_conv_pallas(x_nchw, w, bias, gamma, beta, *,
                        tk_pref=512, thw_pref=2048):
    """Fused 1x1 Conv2d(+bias) -> BatchNorm2d (train-mode stats) -> ReLU.

    x_nchw : (N, C_in, H, W)
    w      : (C_out, C_in)  -- PyTorch Conv2d weight with the 1x1 taps squeezed
    bias   : (C_out,)       -- Conv2d bias
    gamma, beta : (C_out,)  -- BatchNorm2d affine parameters
    """
    N, C_in, H, W = x_nchw.shape
    C_out = w.shape[0]
    HW = H * W

    tk = _largest_tile(C_in, tk_pref, 128)
    thw = _largest_tile(HW, thw_pref, 128)
    num_k = C_in // tk
    num_hw = HW // thw
    out_dtype = x_nchw.dtype

    # NCHW-native: pure reshape (no HBM transpose passes); bf16 MXU inputs.
    x3 = x_nchw.reshape(N, C_in, HW).astype(jnp.bfloat16)
    wt = w.astype(jnp.bfloat16)                                # (C_out, C_in)
    bias2 = bias.reshape(C_out, 1).astype(jnp.float32)

    # ---- Pass 1: 1x1 conv matmul (+bias) + per-tile partial BN statistics --
    y, psum, psq = pl.pallas_call(
        _conv_stats_kernel,
        out_shape=(
            jax.ShapeDtypeStruct((N, C_out, HW), jnp.float32),
            jax.ShapeDtypeStruct((N, num_hw, C_out, 1), jnp.float32),
            jax.ShapeDtypeStruct((N, num_hw, C_out, 1), jnp.float32),
        ),
        grid_spec=pltpu.PrefetchScalarGridSpec(
            num_scalar_prefetch=0,
            grid=(N, num_hw, num_k),
            in_specs=[
                pl.BlockSpec((C_out, tk), lambda n, h, k: (0, k)),       # W
                pl.BlockSpec((1, tk, thw), lambda n, h, k: (n, k, h)),   # x
                pl.BlockSpec((C_out, 1), lambda n, h, k: (0, 0)),        # bias
            ],
            out_specs=(
                pl.BlockSpec((1, C_out, thw), lambda n, h, k: (n, 0, h)),
                pl.BlockSpec((1, 1, C_out, 1), lambda n, h, k: (n, h, 0, 0)),
                pl.BlockSpec((1, 1, C_out, 1), lambda n, h, k: (n, h, 0, 0)),
            ),
        ),
        compiler_params=pltpu.CompilerParams(
            dimension_semantics=("parallel", "parallel", "arbitrary")),
    )(wt, x3, bias2)

    # ---- Pass 2 (tiny, plain XLA): combine partials -> per-channel scale/shift
    m_total = jnp.float32(N * HW)
    s1 = jnp.sum(psum, axis=(0, 1))                            # (C_out, 1)
    s2 = jnp.sum(psq, axis=(0, 1))                             # (C_out, 1)
    mean = s1 / m_total
    var = jnp.maximum(s2 / m_total - mean * mean, 0.0)         # biased variance
    inv = jax.lax.rsqrt(var + BN_EPS)
    scale = inv * gamma.reshape(C_out, 1).astype(jnp.float32)
    shift = beta.reshape(C_out, 1).astype(jnp.float32) - mean * scale

    # ---- Pass 3: normalize + ReLU (mem-bound elementwise, lane-dense) ------
    out3 = pl.pallas_call(
        _bn_relu_kernel,
        out_shape=jax.ShapeDtypeStruct((N, C_out, HW), out_dtype),
        grid_spec=pltpu.PrefetchScalarGridSpec(
            num_scalar_prefetch=0,
            grid=(N, num_hw),
            in_specs=[
                pl.BlockSpec((1, C_out, thw), lambda n, h: (n, 0, h)),
                pl.BlockSpec((C_out, 1), lambda n, h: (0, 0)),
                pl.BlockSpec((C_out, 1), lambda n, h: (0, 0)),
            ],
            out_specs=pl.BlockSpec((1, C_out, thw), lambda n, h: (n, 0, h)),
        ),
        compiler_params=pltpu.CompilerParams(
            dimension_semantics=("parallel", "parallel")),
    )(y, scale, shift)

    return out3.reshape(N, C_out, H, W)


def _reference(x_nchw, w, bias, gamma, beta):
    """Pure-JAX reference: conv(+bias) -> train-mode BN (biased var) -> ReLU."""
    xb = x_nchw.astype(jnp.bfloat16).astype(jnp.float32)
    wb = w.astype(jnp.bfloat16).astype(jnp.float32)
    y = jnp.einsum("oc,nchw->nohw", wb, xb) + bias[None, :, None, None]
    mean = jnp.mean(y, axis=(0, 2, 3), keepdims=True)
    var = jnp.mean((y - mean) ** 2, axis=(0, 2, 3), keepdims=True)
    yn = (y - mean) * jax.lax.rsqrt(var + BN_EPS)
    yn = yn * gamma[None, :, None, None] + beta[None, :, None, None]
    return jnp.maximum(yn, 0.0)


if __name__ == "__main__":
    # Small shapes (module default is in_channels=6000, out_channels=64).
    N, C_in, H, W = 2, 256, 16, 16
    C_out = 64

    key = jax.random.PRNGKey(0)
    kx, kw, kb, kg, kbe = jax.random.split(key, 5)

    x = jax.random.normal(kx, (N, C_in, H, W), dtype=jnp.float32)
    # Conv2d weight (C_out, C_in, 1, 1) squeezed -> (C_out, C_in)
    w = jax.random.normal(kw, (C_out, C_in), dtype=jnp.float32) * 0.02
    bias = jax.random.normal(kb, (C_out,), dtype=jnp.float32) * 0.1
    gamma = 1.0 + 0.1 * jax.random.normal(kg, (C_out,), dtype=jnp.float32)
    beta = 0.1 * jax.random.normal(kbe, (C_out,), dtype=jnp.float32)

    out = initial_conv_pallas(x, w, bias, gamma, beta)
    out = jax.block_until_ready(out)

    ref = _reference(x, w, bias, gamma, beta)
    assert out.shape == (N, C_out, H, W)
    max_err = float(jnp.max(jnp.abs(out - ref)))
    assert max_err < 5e-3, f"max abs err {max_err}"

    print("KERNEL_OK")
</pallas_src>

<mosaic_0001>
module attributes {stable_mosaic.version = 11 : i64} {
  func.func @_conv_stats_kernel(%arg0: i32, %arg1: i32, %arg2: i32, %arg3: memref<64x256xbf16, #tpu.memory_space<vmem>>, %arg4: memref<1x256x256xbf16, #tpu.memory_space<vmem>>, %arg5: memref<64x1xf32, #tpu.memory_space<vmem>>, %arg6: memref<1x64x256xf32, #tpu.memory_space<vmem>>, %arg7: memref<1x1x64x1xf32, #tpu.memory_space<vmem>>, %arg8: memref<1x1x64x1xf32, #tpu.memory_space<vmem>>) attributes {dimension_semantics = [#tpu.dimension_semantics<parallel>, #tpu.dimension_semantics<parallel>, #tpu.dimension_semantics<arbitrary>], iteration_bounds = array<i64: 2, 1, 1>, scalar_prefetch = 0 : i64, scratch_operands = 0 : i64, tpu.core_type = #tpu.core_type<tc>, window_params = [{transform_indices = @transform_0, window_bounds = array<i64: 64, 256>}, {transform_indices = @transform_1, window_bounds = array<i64: 1, 256, 256>}, {pipeline_mode = #tpu.pipeline_mode<synchronous>, transform_indices = @transform_2, window_bounds = array<i64: 64, 1>}, {transform_indices = @transform_3, window_bounds = array<i64: 1, 64, 256>}, {transform_indices = @transform_4, window_bounds = array<i64: 1, 1, 64, 1>}, {transform_indices = @transform_5, window_bounds = array<i64: 1, 1, 64, 1>}]} {
    %c0_i32 = arith.constant 0 : i32
    %0 = arith.cmpi eq, %arg2, %c0_i32 : i32
    %1 = arith.extui %0 : i1 to i32
    %c0_i32_0 = arith.constant 0 : i32
    %2 = arith.cmpi ne, %1, %c0_i32_0 : i32
    scf.if %2 {
      %c0_13 = arith.constant 0 : index
      %c0_14 = arith.constant 0 : index
      %16 = vector.load %arg5[%c0_13, %c0_14] : memref<64x1xf32, #tpu.memory_space<vmem>>, vector<64x1xf32>
      %17 = vector.shape_cast %16 : vector<64x1xf32> to vector<64x1xf32>
      %18 = vector.broadcast %17 : vector<64x1xf32> to vector<64x256xf32>
      %c0_15 = arith.constant 0 : index
      %c0_16 = arith.constant 0 : index
      %c0_17 = arith.constant 0 : index
      %19 = vector.load %arg6[%c0_15, %c0_16, %c0_17] : memref<1x64x256xf32, #tpu.memory_space<vmem>>, vector<1x64x256xf32>
      %20 = vector.shape_cast %19 : vector<1x64x256xf32> to vector<64x256xf32>
      %21 = vector.shape_cast %18 : vector<64x256xf32> to vector<1x64x256xf32>
      tpu.vector_store %arg6[%c0_15, %c0_16, %c0_17], %21 {strides = array<i32>} : memref<1x64x256xf32, #tpu.memory_space<vmem>>, vector<1x64x256xf32>,
    } else {
    }
    %c0 = arith.constant 0 : index
    %c0_1 = arith.constant 0 : index
    %c0_2 = arith.constant 0 : index
    %3 = vector.load %arg6[%c0, %c0_1, %c0_2] : memref<1x64x256xf32, #tpu.memory_space<vmem>>, vector<1x64x256xf32>
    %4 = vector.shape_cast %3 : vector<1x64x256xf32> to vector<64x256xf32>
    %c0_3 = arith.constant 0 : index
    %c0_4 = arith.constant 0 : index
    %5 = vector.load %arg3[%c0_3, %c0_4] : memref<64x256xbf16, #tpu.memory_space<vmem>>, vector<64x256xbf16>
    %c0_5 = arith.constant 0 : index
    %c0_6 = arith.constant 0 : index
    %c0_7 = arith.constant 0 : index
    %6 = vector.load %arg4[%c0_5, %c0_6, %c0_7] : memref<1x256x256xbf16, #tpu.memory_space<vmem>>, vector<1x256x256xbf16>
    %7 = vector.shape_cast %6 : vector<1x256x256xbf16> to vector<256x256xbf16>
    %cst = arith.constant dense<0.000000e+00> : vector<64x256xf32>
    %8 = tpu.matmul %5, %7, %cst {dimension_numbers = #tpu.dot_dimension_numbers<[1], [0], [0], [1], [0, 0, 1, 1], [], []>} : vector<64x256xbf16>, vector<256x256xbf16>, vector<64x256xf32> -> vector<64x256xf32>
    %9 = arith.addf %4, %8 : vector<64x256xf32>
    %c0_8 = arith.constant 0 : index
    %c0_9 = arith.constant 0 : index
    %c0_10 = arith.constant 0 : index
    %10 = vector.load %arg6[%c0_8, %c0_9, %c0_10] : memref<1x64x256xf32, #tpu.memory_space<vmem>>, vector<1x64x256xf32>
    %11 = vector.shape_cast %10 : vector<1x64x256xf32> to vector<64x256xf32>
    %12 = vector.shape_cast %9 : vector<64x256xf32> to vector<1x64x256xf32>
    tpu.vector_store %arg6[%c0_8, %c0_9, %c0_10], %12 {strides = array<i32>} : memref<1x64x256xf32, #tpu.memory_space<vmem>>, vector<1x64x256xf32>,
    %c0_i32_11 = arith.constant 0 : i32
    %13 = arith.cmpi eq, %arg2, %c0_i32_11 : i32
    %14 = arith.extui %13 : i1 to i32
    %c0_i32_12 = arith.constant 0 : i32
    %15 = arith.cmpi ne, %14, %c0_i32_12 : i32
    scf.if %15 {
      %c0_13 = arith.constant 0 : index
      %c0_14 = arith.constant 0 : index
      %c0_15 = arith.constant 0 : index
      %16 = vector.load %arg6[%c0_13, %c0_14, %c0_15] : memref<1x64x256xf32, #tpu.memory_space<vmem>>, vector<1x64x256xf32>
      %17 = vector.shape_cast %16 : vector<1x64x256xf32> to vector<64x256xf32>
      %cst_16 = arith.constant dense<0.000000e+00> : vector<64xf32>
      %18 = vector.multi_reduction <add>, %17, %cst_16 [1] : vector<64x256xf32> to vector<64xf32>
      %19 = vector.shape_cast %18 : vector<64xf32> to vector<64x1xf32>
      %c0_17 = arith.constant 0 : index
      %c0_18 = arith.constant 0 : index
      %c0_19 = arith.constant 0 : index
      %c0_20 = arith.constant 0 : index
      %20 = vector.load %arg7[%c0_17, %c0_18, %c0_19, %c0_20] : memref<1x1x64x1xf32, #tpu.memory_space<vmem>>, vector<1x1x64x1xf32>
      %21 = vector.shape_cast %20 : vector<1x1x64x1xf32> to vector<64x1xf32>
      %22 = vector.shape_cast %19 : vector<64x1xf32> to vector<1x1x64x1xf32>
      tpu.vector_store %arg7[%c0_17, %c0_18, %c0_19, %c0_20], %22 {strides = array<i32>} : memref<1x1x64x1xf32, #tpu.memory_space<vmem>>, vector<1x1x64x1xf32>,
      %23 = arith.mulf %17, %17 : vector<64x256xf32>
      %cst_21 = arith.constant dense<0.000000e+00> : vector<64xf32>
      %24 = vector.multi_reduction <add>, %23, %cst_21 [1] : vector<64x256xf32> to vector<64xf32>
      %25 = vector.shape_cast %24 : vector<64xf32> to vector<64x1xf32>
      %c0_22 = arith.constant 0 : index
      %c0_23 = arith.constant 0 : index
      %c0_24 = arith.constant 0 : index
      %c0_25 = arith.constant 0 : index
      %26 = vector.load %arg8[%c0_22, %c0_23, %c0_24, %c0_25] : memref<1x1x64x1xf32, #tpu.memory_space<vmem>>, vector<1x1x64x1xf32>
      %27 = vector.shape_cast %26 : vector<1x1x64x1xf32> to vector<64x1xf32>
      %28 = vector.shape_cast %25 : vector<64x1xf32> to vector<1x1x64x1xf32>
      tpu.vector_store %arg8[%c0_22, %c0_23, %c0_24, %c0_25], %28 {strides = array<i32>} : memref<1x1x64x1xf32, #tpu.memory_space<vmem>>, vector<1x1x64x1xf32>,
    } else {
    }
    return
  }
  func.func @transform_0(%arg0: i32, %arg1: i32, %arg2: i32) -> (i32, i32) {
    %c0_i32 = arith.constant 0 : i32
    %c0_i32_0 = arith.constant 0 : i32
    return %c0_i32, %arg2 : i32, i32
  }
  func.func @transform_1(%arg0: i32, %arg1: i32, %arg2: i32) -> (i32, i32, i32) {
    %c0_i32 = arith.constant 0 : i32
    return %arg0, %arg2, %arg1 : i32, i32, i32
  }
  func.func @transform_2(%arg0: i32, %arg1: i32, %arg2: i32) -> (i32, i32) {
    %c0_i32 = arith.constant 0 : i32
    %c0_i32_0 = arith.constant 0 : i32
    %c0_i32_1 = arith.constant 0 : i32
    return %c0_i32, %c0_i32_0 : i32, i32
  }
  func.func @transform_3(%arg0: i32, %arg1: i32, %arg2: i32) -> (i32, i32, i32) {
    %c0_i32 = arith.constant 0 : i32
    %c0_i32_0 = arith.constant 0 : i32
    return %arg0, %c0_i32, %arg1 : i32, i32, i32
  }
  func.func @transform_4(%arg0: i32, %arg1: i32, %arg2: i32) -> (i32, i32, i32, i32) {
    %c0_i32 = arith.constant 0 : i32
    %c0_i32_0 = arith.constant 0 : i32
    %c0_i32_1 = arith.constant 0 : i32
    return %arg0, %arg1, %c0_i32, %c0_i32_0 : i32, i32, i32, i32
  }
  func.func @transform_5(%arg0: i32, %arg1: i32, %arg2: i32) -> (i32, i32, i32, i32) {
    %c0_i32 = arith.constant 0 : i32
    %c0_i32_0 = arith.constant 0 : i32
    %c0_i32_1 = arith.constant 0 : i32
    return %arg0, %arg1, %c0_i32, %c0_i32_0 : i32, i32, i32, i32
  }
}

module attributes {stable_mosaic.version = 11 : i64} {
  func.func @_bn_relu_kernel(%arg0: i32, %arg1: i32, %arg2: memref<1x64x256xf32, #tpu.memory_space<vmem>>, %arg3: memref<64x1xf32, #tpu.memory_space<vmem>>, %arg4: memref<64x1xf32, #tpu.memory_space<vmem>>, %arg5: memref<1x64x256xf32, #tpu.memory_space<vmem>>) attributes {dimension_semantics = [#tpu.dimension_semantics<parallel>, #tpu.dimension_semantics<parallel>], iteration_bounds = array<i64: 2, 1>, scalar_prefetch = 0 : i64, scratch_operands = 0 : i64, tpu.core_type = #tpu.core_type<tc>, window_params = [{transform_indices = @transform_0, window_bounds = array<i64: 1, 64, 256>}, {pipeline_mode = #tpu.pipeline_mode<synchronous>, transform_indices = @transform_1, window_bounds = array<i64: 64, 1>}, {pipeline_mode = #tpu.pipeline_mode<synchronous>, transform_indices = @transform_2, window_bounds = array<i64: 64, 1>}, {transform_indices = @transform_3, window_bounds = array<i64: 1, 64, 256>}]} {
    %c0 = arith.constant 0 : index
    %c0_0 = arith.constant 0 : index
    %c0_1 = arith.constant 0 : index
    %0 = vector.load %arg2[%c0, %c0_0, %c0_1] : memref<1x64x256xf32, #tpu.memory_space<vmem>>, vector<1x64x256xf32>
    %1 = vector.shape_cast %0 : vector<1x64x256xf32> to vector<64x256xf32>
    %c0_2 = arith.constant 0 : index
    %c0_3 = arith.constant 0 : index
    %2 = vector.load %arg3[%c0_2, %c0_3] : memref<64x1xf32, #tpu.memory_space<vmem>>, vector<64x1xf32>
    %3 = vector.broadcast %2 : vector<64x1xf32> to vector<64x256xf32>
    %4 = arith.mulf %1, %3 : vector<64x256xf32>
    %c0_4 = arith.constant 0 : index
    %c0_5 = arith.constant 0 : index
    %5 = vector.load %arg4[%c0_4, %c0_5] : memref<64x1xf32, #tpu.memory_space<vmem>>, vector<64x1xf32>
    %6 = vector.broadcast %5 : vector<64x1xf32> to vector<64x256xf32>
    %7 = arith.addf %4, %6 : vector<64x256xf32>
    %cst = arith.constant 0.000000e+00 : f32
    %8 = vector.broadcast %cst : f32 to vector<64x256xf32>
    %9 = arith.maximumf %7, %8 : vector<64x256xf32>
    %c0_6 = arith.constant 0 : index
    %c0_7 = arith.constant 0 : index
    %c0_8 = arith.constant 0 : index
    %10 = vector.load %arg5[%c0_6, %c0_7, %c0_8] : memref<1x64x256xf32, #tpu.memory_space<vmem>>, vector<1x64x256xf32>
    %11 = vector.shape_cast %10 : vector<1x64x256xf32> to vector<64x256xf32>
    %12 = vector.shape_cast %9 : vector<64x256xf32> to vector<1x64x256xf32>
    tpu.vector_store %arg5[%c0_6, %c0_7, %c0_8], %12 {strides = array<i32>} : memref<1x64x256xf32, #tpu.memory_space<vmem>>, vector<1x64x256xf32>,
    return
  }
  func.func @transform_0(%arg0: i32, %arg1: i32) -> (i32, i32, i32) {
    %c0_i32 = arith.constant 0 : i32
    %c0_i32_0 = arith.constant 0 : i32
    return %arg0, %c0_i32, %arg1 : i32, i32, i32
  }
  func.func @transform_1(%arg0: i32, %arg1: i32) -> (i32, i32) {
    %c0_i32 = arith.constant 0 : i32
    %c0_i32_0 = arith.constant 0 : i32
    %c0_i32_1 = arith.constant 0 : i32
    return %c0_i32, %c0_i32_0 : i32, i32
  }
  func.func @transform_2(%arg0: i32, %arg1: i32) -> (i32, i32) {
    %c0_i32 = arith.constant 0 : i32
    %c0_i32_0 = arith.constant 0 : i32
    %c0_i32_1 = arith.constant 0 : i32
    return %c0_i32, %c0_i32_0 : i32, i32
  }
  func.func @transform_3(%arg0: i32, %arg1: i32) -> (i32, i32, i32) {
    %c0_i32 = arith.constant 0 : i32
    %c0_i32_0 = arith.constant 0 : i32
    return %arg0, %c0_i32, %arg1 : i32, i32, i32
  }
}

</mosaic_0001>

<llo_original>
// kernel: initial_conv_pallas.3
$region0: #{initial_conv_pallas.3}
  #allocation0 [shape = 'u32[]', space=smem, size = 0x4, offset = 0x4, fixed_abs, tag = 'smem constant byte address 0x4 - core index']
  #allocation1 [shape = 'u32[144,128]{1,0:T(1,128)}', space=vmem, size = 0x12000, scoped, tag = 'internal scratch']
  %s0 = inlined_call_operand.vmem [shape: f32[2,64,256], index: 0, kind: input, shape index: {}]
  %s1 = inlined_call_operand.vmem [shape: f32[64,1], index: 1, kind: input, shape index: {}]
  %s2 = inlined_call_operand.vmem [shape: f32[64,1], index: 2, kind: input, shape index: {}]
  %s3 = inlined_call_operand.vmem [shape: f32[2,64,256], index: 3, kind: output, shape index: {}]
  %s4 = sld [smem:[#allocation0]]
  $region45: #{initial_conv_pallas.3} parent=0
    _
  %s6 = ssub.s32 1, %s4
  %s7 = scalar_select 0, %s6, %s4
  loop: start=0, step=1, limit=4
  $region2: #{initial_conv_pallas.3} parent=0 // loop_pre_header
    _
  $region3: #{initial_conv_pallas.3} parent=0 // loop_header
    %s9 = sphi 0, %s13
    %p10 = scmp.ge.s32.totalorder %s9, 4
    %s16 = sphi 0, %s28
    %s17 = sphi 0, %s24
    %s18 = sphi 0, %s16
    %s19 = sphi 0, %s17
    %s20 = sphi 0, %s18
    %s21 = sphi 0, %s19
    %s33 = sphi 0, %s35
    %s36 = sphi 0, %s33
    %s37 = sphi 0, %s36
    %s53 = sphi 0, %s37
    %s57 = sphi 0, %s57
    %s59 = sphi 0, %s57
    %s60 = sphi 0, %s59
    %s74 = sphi 0, %s60
    %s78 = sphi 0, %s78
    %s80 = sphi 0, %s78
    %s81 = sphi 0, %s80
    %s95 = sphi 0, %s81
    %s103 = sphi 0, %s105
    %s106 = sphi 0, %s103
    %s107 = sphi 0, %s106
    %s123 = sphi 0, %s107
  $region4: #{initial_conv_pallas.3} parent=0 // loop_header_branch
    %12 = sbr.rel (%p10) target = $region8
  $region5: #{initial_conv_pallas.3} parent=0 // loop_body
    %s14 = ssub.s32 %s9, 1
    %s15 = ssub.s32 %s9, 2
    %s22 = sadd.s32 1, %s17
    %p23 = scmp.ge.s32.totalorder %s22, 1
    %s24 = scalar_select %p23, 0, %s22
    %s25 = sadd.s32 1, %s16
    %s26 = scalar_select %p23, %s25, %s16
    %p27 = scmp.ge.s32.totalorder %s26, 2
    %s28 = scalar_select %p27, 0, %s26
    %s29 = ssub.s32 %s16, %s28
    %s30 = ssub.s32 %s17, %s24
    %s31 = sor.u32 %s29, %s30
    %p32 = scmp.eq.s32.totalorder %s31, 0
    %s34 = sadd.s32 %s33, 1
    %s35 = scalar_select %p32, %s33, %s34
    %p38 = pneg %p32
    %p39 = scmp.eq.s32.totalorder %s9, 1
    %p40 = por %p38, %p39
    %p41 = scmp.ne.s32.totalorder %s33, %s36
    %p42 = scmp.eq.s32.totalorder %s9, 0
    %p43 = por %p41, %p42
    %p44 = scmp.ne.s32.totalorder %s33, %s36
    %p45 = scmp.eq.s32.totalorder %s14, 1
    %p46 = por %p44, %p45
    %p47 = scmp.ne.s32.totalorder %s36, %s37
    %p48 = scmp.eq.s32.totalorder %s14, 0
    %p49 = por %p47, %p48
    %p50 = scmp.ne.s32.totalorder %s36, %s37
    %p51 = scmp.eq.s32.totalorder %s15, 1
    %p52 = por %p50, %p51
    %p54 = scmp.ne.s32.totalorder %s37, %s53
    %p55 = scmp.eq.s32.totalorder %s15, 0
    %p56 = por %p54, %p55
    %s58 = sadd.s32 %s57, 1
    %p61 = scmp.eq.s32.totalorder %s9, 1
    %p62 = scmp.ne.s32.totalorder %s57, %s59
    %p63 = scmp.eq.s32.totalorder %s9, 0
    %p64 = por %p62, %p63
    %p65 = scmp.ne.s32.totalorder %s57, %s59
    %p66 = scmp.eq.s32.totalorder %s14, 1
    %p67 = por %p65, %p66
    %p68 = scmp.ne.s32.totalorder %s59, %s60
    %p69 = scmp.eq.s32.totalorder %s14, 0
    %p70 = por %p68, %p69
    %p71 = scmp.ne.s32.totalorder %s59, %s60
    %p72 = scmp.eq.s32.totalorder %s15, 1
    %p73 = por %p71, %p72
    %p75 = scmp.ne.s32.totalorder %s60, %s74
    %p76 = scmp.eq.s32.totalorder %s15, 0
    %p77 = por %p75, %p76
    %s79 = sadd.s32 %s78, 1
    %p82 = scmp.eq.s32.totalorder %s9, 1
    %p83 = scmp.ne.s32.totalorder %s78, %s80
    %p84 = scmp.eq.s32.totalorder %s9, 0
    %p85 = por %p83, %p84
    %p86 = scmp.ne.s32.totalorder %s78, %s80
    %p87 = scmp.eq.s32.totalorder %s14, 1
    %p88 = por %p86, %p87
    %p89 = scmp.ne.s32.totalorder %s80, %s81
    %p90 = scmp.eq.s32.totalorder %s14, 0
    %p91 = por %p89, %p90
    %p92 = scmp.ne.s32.totalorder %s80, %s81
    %p93 = scmp.eq.s32.totalorder %s15, 1
    %p94 = por %p92, %p93
    %p96 = scmp.ne.s32.totalorder %s81, %s95
    %p97 = scmp.eq.s32.totalorder %s15, 0
    %p98 = por %p96, %p97
    %s99 = ssub.s32 %s16, %s28
    %s100 = ssub.s32 %s17, %s24
    %s101 = sor.u32 %s99, %s100
    %p102 = scmp.eq.s32.totalorder %s101, 0
    %s104 = sadd.s32 %s103, 1
    %s105 = scalar_select %p102, %s103, %s104
    %p108 = pneg %p102
    %p109 = scmp.eq.s32.totalorder %s9, 1
    %p110 = por %p108, %p109
    %p111 = scmp.ne.s32.totalorder %s103, %s106
    %p112 = scmp.eq.s32.totalorder %s9, 0
    %p113 = por %p111, %p112
    %p114 = scmp.ne.s32.totalorder %s103, %s106
    %p115 = scmp.eq.s32.totalorder %s14, 1
    %p116 = por %p114, %p115
    %p117 = scmp.ne.s32.totalorder %s106, %s107
    %p118 = scmp.eq.s32.totalorder %s14, 0
    %p119 = por %p117, %p118
    %p120 = scmp.ne.s32.totalorder %s106, %s107
    %p121 = scmp.eq.s32.totalorder %s15, 1
    %p122 = por %p120, %p121
    %p124 = scmp.ne.s32.totalorder %s107, %s123
    %p125 = scmp.eq.s32.totalorder %s15, 0
    %p126 = por %p124, %p125
    %p127 = scmp.le.s32.totalorder 1, %s9
    %p128 = scmp.lt.s32.totalorder %s9, 3
    %p129 = pnand %p127, %p128
    %p130 = pneg %p129
    // Predicated region
    $region9: #{initial_conv_pallas.3} parent=5 // pred_check
      _
    $region10: #{initial_conv_pallas.3} parent=5 // pred_check_branch
      %132 = sbr.rel (%p129) target = $region12
    $region11: #{initial_conv_pallas.3} parent=5 // pred_region
      %s133 = ssub.s32 %s9, 1
      // Predicated region
      $region13: #{initial_conv_pallas.3} parent=11 // pred_check
        %p134 = pneg %p70
      $region14: #{initial_conv_pallas.3} parent=11 // pred_check_branch
        %136 = sbr.rel (%p134) target = $region16
      $region15: #{initial_conv_pallas.3} parent=11 // pred_region
        _
      $region16: #{initial_conv_pallas.3} parent=11 // pred_fallthru
        _
      // Predicated region
      $region17: #{initial_conv_pallas.3} parent=11 // pred_check
        %p137 = pneg %p91
      $region18: #{initial_conv_pallas.3} parent=11 // pred_check_branch
        %139 = sbr.rel (%p137) target = $region20
      $region19: #{initial_conv_pallas.3} parent=11 // pred_region
        _
      $region20: #{initial_conv_pallas.3} parent=11 // pred_fallthru
        _
    $region12: #{initial_conv_pallas.3} parent=5 // pred_fallthru
      _
    %p140 = scmp.lt.s32.totalorder %s9, 2
    // Predicated region
    $region21: #{initial_conv_pallas.3} parent=5 // pred_check
      %p141 = pneg %p140
    $region22: #{initial_conv_pallas.3} parent=5 // pred_check_branch
      %143 = sbr.rel (%p141) target = $region24
    $region23: #{initial_conv_pallas.3} parent=5 // pred_region
      // Predicated region
      $region25: #{initial_conv_pallas.3} parent=23 // pred_check
        %p144 = pneg %p43
      $region26: #{initial_conv_pallas.3} parent=23 // pred_check_branch
        %146 = sbr.rel (%p144) target = $region28
      $region27: #{initial_conv_pallas.3} parent=23 // pred_region
        %s147 = smul.u32 2, %s17
        %p148 = scmp.lt.s32.totalorder %s16, 1
        %s149 = scalar_select %p148, %s16, 1
        %p150 = scmp.lt.s32.totalorder %s147, 1
        %s151 = scalar_select %p150, %s147, 1
        %s152 = smul.addr %s149, 16
        %s153 = sadd.s32 %s151, %s152
        %s154 = smul.addr %s153, 8
        %s155 = scalar_lea.vmem %s0, %s154
        %s156 = smul.u32 2, %s17
      $region28: #{initial_conv_pallas.3} parent=23 // pred_fallthru
        _
    $region24: #{initial_conv_pallas.3} parent=5 // pred_fallthru
      _
    %p157 = scmp.le.s32.totalorder 1, %s9
    %p158 = scmp.lt.s32.totalorder %s9, 3
    %p159 = pnand %p157, %p158
    %p160 = pneg %p159
    // Predicated region
    $region29: #{initial_conv_pallas.3} parent=5 // pred_check
      _
    $region30: #{initial_conv_pallas.3} parent=5 // pred_check_branch
      %162 = sbr.rel (%p159) target = $region32
    $region31: #{initial_conv_pallas.3} parent=5 // pred_region
      %s163 = ssub.s32 %s9, 1
      %s164 = smul.u32 2, %s19
      %p165 = scmp.lt.s32.totalorder %s18, 1
      %s166 = scalar_select %p165, %s18, 1
      %p167 = scmp.lt.s32.totalorder %s164, 1
      %s168 = scalar_select %p167, %s164, 1
      %s169 = smul.addr %s166, 16
      %s170 = sadd.s32 %s168, %s169
      %s171 = smul.addr %s170, 8
      %s172 = scalar_lea.vmem %s0, %s171
      %p173 = pneg %p49
      %p174 = pneg %p46
      %p175 = pneg %p70
      %p176 = pneg %p67
      %p177 = pneg %p91
      %p178 = pneg %p88
      %p179 = pneg %p119
      %p180 = pneg %p116
      %s181 = smul.u32 2, %s19
      %p182 = scmp.lt.s32.totalorder %s18, 1
      %s183 = scalar_select %p182, %s18, 1
      %p184 = scmp.lt.s32.totalorder %s181, 1
      %s185 = scalar_select %p184, %s181, 1
      %s186 = smul.addr %s183, 16
      %s187 = sadd.s32 %s185, %s186
      %s188 = smul.addr %s187, 8
      %s189 = scalar_lea.vmem %s3, %s188
      %s190 = smul.u32 2, %s19
      %p191 = scmp.lt.s32.totalorder %s18, 1
      %s192 = scalar_select %p191, %s18, 1
      %p193 = scmp.lt.s32.totalorder %s190, 1
      %s194 = scalar_select %p193, %s190, 1
      %s195 = smul.addr %s192, 16
      %s196 = sadd.s32 %s194, %s195
      %s197 = smul.addr %s196, 8
      %s198 = scalar_lea.vmem %s0, %s197
      %s199 = smul.u32 2, %s19
      %s200 = smul.u32 2, %s19
      %p201 = scmp.lt.s32.totalorder %s18, 1
      %s202 = scalar_select %p201, %s18, 1
      %p203 = scmp.lt.s32.totalorder %s200, 1
      %s204 = scalar_select %p203, %s200, 1
      %s205 = smul.addr %s202, 16
      %s206 = sadd.s32 %s204, %s205
      %s207 = smul.addr %s206, 8
      %s208 = scalar_lea.vmem %s3, %s207
      %s209 = smul.u32 2, %s19
      %v210 = vld [vmem:[%s198] sm:$0xff]
      %v211 = vld [vmem:[%s198 + $0x8] sm:$0xff]
      %v212 = vld [vmem:[%s198 + $0x10] sm:$0xff]
      %v213 = vld [vmem:[%s198 + $0x18] sm:$0xff]
      %v214 = vld [vmem:[%s198 + $0x20] sm:$0xff]
      %v215 = vld [vmem:[%s198 + $0x28] sm:$0xff]
      %v216 = vld [vmem:[%s198 + $0x30] sm:$0xff]
      %v217 = vld [vmem:[%s198 + $0x38] sm:$0xff]
      %v218 = vld [vmem:[%s198 + $0x40] sm:$0xff]
      %v219 = vld [vmem:[%s198 + $0x48] sm:$0xff]
      %v220 = vld [vmem:[%s198 + $0x50] sm:$0xff]
      %v221 = vld [vmem:[%s198 + $0x58] sm:$0xff]
      %v222 = vld [vmem:[%s198 + $0x60] sm:$0xff]
      %v223 = vld [vmem:[%s198 + $0x68] sm:$0xff]
      %v224 = vld [vmem:[%s198 + $0x70] sm:$0xff]
      %v225 = vld [vmem:[%s198 + $0x78] sm:$0xff]
      %v226 = vld [vmem:[%s1] sm:$0xff]
      %v227 = vld [vmem:[%s1 + $0x8] sm:$0xff]
      %v228 = vld [vmem:[%s1 + $0x10] sm:$0xff]
      %v229 = vld [vmem:[%s1 + $0x18] sm:$0xff]
      %v230 = vld [vmem:[%s1 + $0x20] sm:$0xff]
      %v231 = vld [vmem:[%s1 + $0x28] sm:$0xff]
      %v232 = vld [vmem:[%s1 + $0x30] sm:$0xff]
      %v233 = vld [vmem:[%s1 + $0x38] sm:$0xff]
      %235 = vset.pattern.permute.xlu0 0
      %236 = vperm.xlu0 %235, %v226
      %v237 = vpop.permute.xlu0 %236
      %240 = vset.pattern.permute.xlu0 0
      %241 = vperm.xlu0 %240, %v227
      %v242 = vpop.permute.xlu0 %241
      %245 = vset.pattern.permute.xlu0 0
      %246 = vperm.xlu0 %245, %v228
      %v247 = vpop.permute.xlu0 %246
      %250 = vset.pattern.permute.xlu0 0
      %251 = vperm.xlu0 %250, %v229
      %v252 = vpop.permute.xlu0 %251
      %255 = vset.pattern.permute.xlu0 0
      %256 = vperm.xlu0 %255, %v230
      %v257 = vpop.permute.xlu0 %256
      %260 = vset.pattern.permute.xlu0 0
      %261 = vperm.xlu0 %260, %v231
      %v262 = vpop.permute.xlu0 %261
      %265 = vset.pattern.permute.xlu0 0
      %266 = vperm.xlu0 %265, %v232
      %v267 = vpop.permute.xlu0 %266
      %270 = vset.pattern.permute.xlu0 0
      %271 = vperm.xlu0 %270, %v233
      %v272 = vpop.permute.xlu0 %271
      %v274 = vmul.f32 %v210, %v237
      %v275 = vmul.f32 %v211, %v237
      %v276 = vmul.f32 %v212, %v242
      %v277 = vmul.f32 %v213, %v242
      %v278 = vmul.f32 %v214, %v247
      %v279 = vmul.f32 %v215, %v247
      %v280 = vmul.f32 %v216, %v252
      %v281 = vmul.f32 %v217, %v252
      %v282 = vmul.f32 %v218, %v257
      %v283 = vmul.f32 %v219, %v257
      %v284 = vmul.f32 %v220, %v262
      %v285 = vmul.f32 %v221, %v262
      %v286 = vmul.f32 %v222, %v267
      %v287 = vmul.f32 %v223, %v267
      %v288 = vmul.f32 %v224, %v272
      %v289 = vmul.f32 %v225, %v272
      %v290 = vld [vmem:[%s2] sm:$0xff]
      %v291 = vld [vmem:[%s2 + $0x8] sm:$0xff]
      %v292 = vld [vmem:[%s2 + $0x10] sm:$0xff]
      %v293 = vld [vmem:[%s2 + $0x18] sm:$0xff]
      %v294 = vld [vmem:[%s2 + $0x20] sm:$0xff]
      %v295 = vld [vmem:[%s2 + $0x28] sm:$0xff]
      %v296 = vld [vmem:[%s2 + $0x30] sm:$0xff]
      %v297 = vld [vmem:[%s2 + $0x38] sm:$0xff]
      %299 = vset.pattern.permute.xlu0 0
      %300 = vperm.xlu0 %299, %v290
      %v301 = vpop.permute.xlu0 %300
      %304 = vset.pattern.permute.xlu0 0
      %305 = vperm.xlu0 %304, %v291
      %v306 = vpop.permute.xlu0 %305
      %309 = vset.pattern.permute.xlu0 0
      %310 = vperm.xlu0 %309, %v292
      %v311 = vpop.permute.xlu0 %310
      %314 = vset.pattern.permute.xlu0 0
      %315 = vperm.xlu0 %314, %v293
      %v316 = vpop.permute.xlu0 %315
      %319 = vset.pattern.permute.xlu0 0
      %320 = vperm.xlu0 %319, %v294
      %v321 = vpop.permute.xlu0 %320
      %324 = vset.pattern.permute.xlu0 0
      %325 = vperm.xlu0 %324, %v295
      %v326 = vpop.permute.xlu0 %325
      %329 = vset.pattern.permute.xlu0 0
      %330 = vperm.xlu0 %329, %v296
      %v331 = vpop.permute.xlu0 %330
      %334 = vset.pattern.permute.xlu0 0
      %335 = vperm.xlu0 %334, %v297
      %v336 = vpop.permute.xlu0 %335
      %v338 = vadd.f32 %v274, %v301
      %v339 = vadd.f32 %v275, %v301
      %v340 = vadd.f32 %v276, %v306
      %v341 = vadd.f32 %v277, %v306
      %v342 = vadd.f32 %v278, %v311
      %v343 = vadd.f32 %v279, %v311
      %v344 = vadd.f32 %v280, %v316
      %v345 = vadd.f32 %v281, %v316
      %v346 = vadd.f32 %v282, %v321
      %v347 = vadd.f32 %v283, %v321
      %v348 = vadd.f32 %v284, %v326
      %v349 = vadd.f32 %v285, %v326
      %v350 = vadd.f32 %v286, %v331
      %v351 = vadd.f32 %v287, %v331
      %v352 = vadd.f32 %v288, %v336
      %v353 = vadd.f32 %v289, %v336
      %v354 = vmax.f32 %v338, 0.0
      %v355 = vmax.f32 %v339, 0.0
      %v356 = vmax.f32 %v340, 0.0
      %v357 = vmax.f32 %v341, 0.0
      %v358 = vmax.f32 %v342, 0.0
      %v359 = vmax.f32 %v343, 0.0
      %v360 = vmax.f32 %v344, 0.0
      %v361 = vmax.f32 %v345, 0.0
      %v362 = vmax.f32 %v346, 0.0
      %v363 = vmax.f32 %v347, 0.0
      %v364 = vmax.f32 %v348, 0.0
      %v365 = vmax.f32 %v349, 0.0
      %v366 = vmax.f32 %v350, 0.0
      %v367 = vmax.f32 %v351, 0.0
      %v368 = vmax.f32 %v352, 0.0
      %v369 = vmax.f32 %v353, 0.0
      %370 = vst [vmem:[%s208] sm:$0xff] %v354
      %371 = vst [vmem:[%s208 + $0x8] sm:$0xff] %v355
      %372 = vst [vmem:[%s208 + $0x10] sm:$0xff] %v356
      %373 = vst [vmem:[%s208 + $0x18] sm:$0xff] %v357
      %374 = vst [vmem:[%s208 + $0x20] sm:$0xff] %v358
      %375 = vst [vmem:[%s208 + $0x28] sm:$0xff] %v359
      %376 = vst [vmem:[%s208 + $0x30] sm:$0xff] %v360
      %377 = vst [vmem:[%s208 + $0x38] sm:$0xff] %v361
      %378 = vst [vmem:[%s208 + $0x40] sm:$0xff] %v362
      %379 = vst [vmem:[%s208 + $0x48] sm:$0xff] %v363
      %380 = vst [vmem:[%s208 + $0x50] sm:$0xff] %v364
      %381 = vst [vmem:[%s208 + $0x58] sm:$0xff] %v365
      %382 = vst [vmem:[%s208 + $0x60] sm:$0xff] %v366
      %383 = vst [vmem:[%s208 + $0x68] sm:$0xff] %v367
      %384 = vst [vmem:[%s208 + $0x70] sm:$0xff] %v368
      %385 = vst [vmem:[%s208 + $0x78] sm:$0xff] %v369
      %s386 = smul.u32 2, %s19
      %p387 = scmp.lt.s32.totalorder %s18, 1
      %s388 = scalar_select %p387, %s18, 1
      %p389 = scmp.lt.s32.totalorder %s386, 1
      %s390 = scalar_select %p389, %s386, 1
      %s391 = smul.addr %s388, 16
      %s392 = sadd.s32 %s390, %s391
      %s393 = smul.addr %s392, 8
      %s394 = scalar_lea.vmem %s3, %s393
      // Predicated region
      $region33: #{initial_conv_pallas.3} parent=31 // pred_check
        %p395 = pneg %p116
      $region34: #{initial_conv_pallas.3} parent=31 // pred_check_branch
        %397 = sbr.rel (%p395) target = $region36
      $region35: #{initial_conv_pallas.3} parent=31 // pred_region
        %s398 = smul.u32 2, %s19
      $region36: #{initial_conv_pallas.3} parent=31 // pred_fallthru
        _
    $region32: #{initial_conv_pallas.3} parent=5 // pred_fallthru
      _
    %p399 = scmp.le.s32.totalorder 2, %s9
    // Predicated region
    $region37: #{initial_conv_pallas.3} parent=5 // pred_check
      %p400 = pneg %p399
    $region38: #{initial_conv_pallas.3} parent=5 // pred_check_branch
      %402 = sbr.rel (%p400) target = $region40
    $region39: #{initial_conv_pallas.3} parent=5 // pred_region
      %s403 = ssub.s32 %s9, 2
      // Predicated region
      $region41: #{initial_conv_pallas.3} parent=39 // pred_check
        %p404 = pneg %p122
      $region42: #{initial_conv_pallas.3} parent=39 // pred_check_branch
        %406 = sbr.rel (%p404) target = $region44
      $region43: #{initial_conv_pallas.3} parent=39 // pred_region
        %s407 = smul.u32 2, %s21
        %p408 = scmp.lt.s32.totalorder %s20, 1
        %s409 = scalar_select %p408, %s20, 1
        %p410 = scmp.lt.s32.totalorder %s407, 1
        %s411 = scalar_select %p410, %s407, 1
        %s412 = smul.addr %s409, 16
        %s413 = sadd.s32 %s411, %s412
        %s414 = smul.addr %s413, 8
        %s415 = scalar_lea.vmem %s3, %s414
      $region44: #{initial_conv_pallas.3} parent=39 // pred_fallthru
        _
    $region40: #{initial_conv_pallas.3} parent=5 // pred_fallthru
      _
  $region6: #{initial_conv_pallas.3} parent=0 // loop_footer
    %s13 = sadd.s32 1, %s9
  $region7: #{initial_conv_pallas.3} parent=0 // loop_footer_branch
    %8 = sbr.rel target = $region3
  $region8: #{initial_conv_pallas.3} parent=0 // loop_exit
    _

// kernel: initial_conv_pallas.2
$region0: #{initial_conv_pallas.2}
  #allocation0 [shape = 'u32[]', space=smem, size = 0x4, offset = 0x4, fixed_abs, tag = 'smem constant byte address 0x4 - core index']
  #allocation1 [shape = 'u32[144,128]{1,0:T(1,128)}', space=vmem, size = 0x12000, scoped, tag = 'internal scratch']
  %s0 = inlined_call_operand.vmem [shape: bf16[64,256], index: 0, kind: input, shape index: {}]
  %s1 = inlined_call_operand.vmem [shape: bf16[2,256,256], index: 1, kind: input, shape index: {}]
  %s2 = inlined_call_operand.vmem [shape: f32[64,1], index: 2, kind: input, shape index: {}]
  %s3 = inlined_call_operand.vmem [shape: f32[2,64,256], index: 3, kind: output, shape index: {0}]
  %s4 = inlined_call_operand.vmem [shape: f32[2,1,64,1], index: 4, kind: output, shape index: {1}]
  %s5 = inlined_call_operand.vmem [shape: f32[2,1,64,1], index: 5, kind: output, shape index: {2}]
  %6 = xla_tuple %s3, %s4, %s5
  %s7 = sld [smem:[#allocation0]]
  $region69: #{initial_conv_pallas.2} parent=0
    _
  %s9 = ssub.s32 1, %s7
  %s10 = scalar_select 0, %s9, %s7
  loop: start=0, step=1, limit=4
  $region2: #{initial_conv_pallas.2} parent=0 // loop_pre_header
    _
  $region3: #{initial_conv_pallas.2} parent=0 // loop_header
    %s12 = sphi 0, %s16
    %p13 = scmp.ge.s32.totalorder %s12, 4
    %s19 = sphi 0, %s38
    %s20 = sphi 0, %s34
    %s21 = sphi 0, %s30
    %s22 = sphi 0, %s19
    %s23 = sphi 0, %s20
    %s24 = sphi 0, %s21
    %s25 = sphi 0, %s22
    %s26 = sphi 0, %s23
    %s27 = sphi 0, %s24
    %s41 = sphi 0, %s43
    %s44 = sphi 0, %s41
    %s45 = sphi 0, %s44
    %s61 = sphi 0, %s45
    %s71 = sphi 0, %s73
    %s74 = sphi 0, %s71
    %s75 = sphi 0, %s74
    %s91 = sphi 0, %s75
    %s95 = sphi 0, %s95
    %s97 = sphi 0, %s95
    %s98 = sphi 0, %s97
    %s112 = sphi 0, %s98
    %s120 = sphi 0, %s122
    %s123 = sphi 0, %s120
    %s124 = sphi 0, %s123
    %s140 = sphi 0, %s124
    %s148 = sphi 0, %s150
    %s151 = sphi 0, %s148
    %s152 = sphi 0, %s151
    %s168 = sphi 0, %s152
    %s176 = sphi 0, %s178
    %s179 = sphi 0, %s176
    %s180 = sphi 0, %s179
    %s196 = sphi 0, %s180
  $region4: #{initial_conv_pallas.2} parent=0 // loop_header_branch
    %15 = sbr.rel (%p13) target = $region8
  $region5: #{initial_conv_pallas.2} parent=0 // loop_body
    %s17 = ssub.s32 %s12, 1
    %s18 = ssub.s32 %s12, 2
    %s28 = sadd.s32 1, %s21
    %p29 = scmp.ge.s32.totalorder %s28, 1
    %s30 = scalar_select %p29, 0, %s28
    %s31 = sadd.s32 1, %s20
    %s32 = scalar_select %p29, %s31, %s20
    %p33 = scmp.ge.s32.totalorder %s32, 1
    %s34 = scalar_select %p33, 0, %s32
    %s35 = sadd.s32 1, %s19
    %s36 = scalar_select %p33, %s35, %s19
    %p37 = scmp.ge.s32.totalorder %s36, 2
    %s38 = scalar_select %p37, 0, %s36
    %s39 = ssub.s32 %s21, %s30
    %p40 = scmp.eq.s32.totalorder %s39, 0
    %s42 = sadd.s32 %s41, 1
    %s43 = scalar_select %p40, %s41, %s42
    %p46 = pneg %p40
    %p47 = scmp.eq.s32.totalorder %s12, 1
    %p48 = por %p46, %p47
    %p49 = scmp.ne.s32.totalorder %s41, %s44
    %p50 = scmp.eq.s32.totalorder %s12, 0
    %p51 = por %p49, %p50
    %p52 = scmp.ne.s32.totalorder %s41, %s44
    %p53 = scmp.eq.s32.totalorder %s17, 1
    %p54 = por %p52, %p53
    %p55 = scmp.ne.s32.totalorder %s44, %s45
    %p56 = scmp.eq.s32.totalorder %s17, 0
    %p57 = por %p55, %p56
    %p58 = scmp.ne.s32.totalorder %s44, %s45
    %p59 = scmp.eq.s32.totalorder %s18, 1
    %p60 = por %p58, %p59
    %p62 = scmp.ne.s32.totalorder %s45, %s61
    %p63 = scmp.eq.s32.totalorder %s18, 0
    %p64 = por %p62, %p63
    %s65 = ssub.s32 %s19, %s38
    %s66 = ssub.s32 %s21, %s30
    %s67 = sor.u32 %s65, %s66
    %s68 = ssub.s32 %s20, %s34
    %s69 = sor.u32 %s67, %s68
    %p70 = scmp.eq.s32.totalorder %s69, 0
    %s72 = sadd.s32 %s71, 1
    %s73 = scalar_select %p70, %s71, %s72
    %p76 = pneg %p70
    %p77 = scmp.eq.s32.totalorder %s12, 1
    %p78 = por %p76, %p77
    %p79 = scmp.ne.s32.totalorder %s71, %s74
    %p80 = scmp.eq.s32.totalorder %s12, 0
    %p81 = por %p79, %p80
    %p82 = scmp.ne.s32.totalorder %s71, %s74
    %p83 = scmp.eq.s32.totalorder %s17, 1
    %p84 = por %p82, %p83
    %p85 = scmp.ne.s32.totalorder %s74, %s75
    %p86 = scmp.eq.s32.totalorder %s17, 0
    %p87 = por %p85, %p86
    %p88 = scmp.ne.s32.totalorder %s74, %s75
    %p89 = scmp.eq.s32.totalorder %s18, 1
    %p90 = por %p88, %p89
    %p92 = scmp.ne.s32.totalorder %s75, %s91
    %p93 = scmp.eq.s32.totalorder %s18, 0
    %p94 = por %p92, %p93
    %s96 = sadd.s32 %s95, 1
    %p99 = scmp.eq.s32.totalorder %s12, 1
    %p100 = scmp.ne.s32.totalorder %s95, %s97
    %p101 = scmp.eq.s32.totalorder %s12, 0
    %p102 = por %p100, %p101
    %p103 = scmp.ne.s32.totalorder %s95, %s97
    %p104 = scmp.eq.s32.totalorder %s17, 1
    %p105 = por %p103, %p104
    %p106 = scmp.ne.s32.totalorder %s97, %s98
    %p107 = scmp.eq.s32.totalorder %s17, 0
    %p108 = por %p106, %p107
    %p109 = scmp.ne.s32.totalorder %s97, %s98
    %p110 = scmp.eq.s32.totalorder %s18, 1
    %p111 = por %p109, %p110
    %p113 = scmp.ne.s32.totalorder %s98, %s112
    %p114 = scmp.eq.s32.totalorder %s18, 0
    %p115 = por %p113, %p114
    %s116 = ssub.s32 %s19, %s38
    %s117 = ssub.s32 %s20, %s34
    %s118 = sor.u32 %s116, %s117
    %p119 = scmp.eq.s32.totalorder %s118, 0
    %s121 = sadd.s32 %s120, 1
    %s122 = scalar_select %p119, %s120, %s121
    %p125 = pneg %p119
    %p126 = scmp.eq.s32.totalorder %s12, 1
    %p127 = por %p125, %p126
    %p128 = scmp.ne.s32.totalorder %s120, %s123
    %p129 = scmp.eq.s32.totalorder %s12, 0
    %p130 = por %p128, %p129
    %p131 = scmp.ne.s32.totalorder %s120, %s123
    %p132 = scmp.eq.s32.totalorder %s17, 1
    %p133 = por %p131, %p132
    %p134 = scmp.ne.s32.totalorder %s123, %s124
    %p135 = scmp.eq.s32.totalorder %s17, 0
    %p136 = por %p134, %p135
    %p137 = scmp.ne.s32.totalorder %s123, %s124
    %p138 = scmp.eq.s32.totalorder %s18, 1
    %p139 = por %p137, %p138
    %p141 = scmp.ne.s32.totalorder %s124, %s140
    %p142 = scmp.eq.s32.totalorder %s18, 0
    %p143 = por %p141, %p142
    %s144 = ssub.s32 %s19, %s38
    %s145 = ssub.s32 %s20, %s34
    %s146 = sor.u32 %s144, %s145
    %p147 = scmp.eq.s32.totalorder %s146, 0
    %s149 = sadd.s32 %s148, 1
    %s150 = scalar_select %p147, %s148, %s149
    %p153 = pneg %p147
    %p154 = scmp.eq.s32.totalorder %s12, 1
    %p155 = por %p153, %p154
    %p156 = scmp.ne.s32.totalorder %s148, %s151
    %p157 = scmp.eq.s32.totalorder %s12, 0
    %p158 = por %p156, %p157
    %p159 = scmp.ne.s32.totalorder %s148, %s151
    %p160 = scmp.eq.s32.totalorder %s17, 1
    %p161 = por %p159, %p160
    %p162 = scmp.ne.s32.totalorder %s151, %s152
    %p163 = scmp.eq.s32.totalorder %s17, 0
    %p164 = por %p162, %p163
    %p165 = scmp.ne.s32.totalorder %s151, %s152
    %p166 = scmp.eq.s32.totalorder %s18, 1
    %p167 = por %p165, %p166
    %p169 = scmp.ne.s32.totalorder %s152, %s168
    %p170 = scmp.eq.s32.totalorder %s18, 0
    %p171 = por %p169, %p170
    %s172 = ssub.s32 %s19, %s38
    %s173 = ssub.s32 %s20, %s34
    %s174 = sor.u32 %s172, %s173
    %p175 = scmp.eq.s32.totalorder %s174, 0
    %s177 = sadd.s32 %s176, 1
    %s178 = scalar_select %p175, %s176, %s177
    %p181 = pneg %p175
    %p182 = scmp.eq.s32.totalorder %s12, 1
    %p183 = por %p181, %p182
    %p184 = scmp.ne.s32.totalorder %s176, %s179
    %p185 = scmp.eq.s32.totalorder %s12, 0
    %p186 = por %p184, %p185
    %p187 = scmp.ne.s32.totalorder %s176, %s179
    %p188 = scmp.eq.s32.totalorder %s17, 1
    %p189 = por %p187, %p188
    %p190 = scmp.ne.s32.totalorder %s179, %s180
    %p191 = scmp.eq.s32.totalorder %s17, 0
    %p192 = por %p190, %p191
    %p193 = scmp.ne.s32.totalorder %s179, %s180
    %p194 = scmp.eq.s32.totalorder %s18, 1
    %p195 = por %p193, %p194
    %p197 = scmp.ne.s32.totalorder %s180, %s196
    %p198 = scmp.eq.s32.totalorder %s18, 0
    %p199 = por %p197, %p198
    %p200 = scmp.le.s32.totalorder 1, %s12
    %p201 = scmp.lt.s32.totalorder %s12, 3
    %p202 = pnand %p200, %p201
    %p203 = pneg %p202
    // Predicated region
    $region9: #{initial_conv_pallas.2} parent=5 // pred_check
      _
    $region10: #{initial_conv_pallas.2} parent=5 // pred_check_branch
      %205 = sbr.rel (%p202) target = $region12
    $region11: #{initial_conv_pallas.2} parent=5 // pred_region
      %s206 = ssub.s32 %s12, 1
      // Predicated region
      $region13: #{initial_conv_pallas.2} parent=11 // pred_check
        %p207 = pneg %p57
      $region14: #{initial_conv_pallas.2} parent=11 // pred_check_branch
        %209 = sbr.rel (%p207) target = $region16
      $region15: #{initial_conv_pallas.2} parent=11 // pred_region
        %s210 = smul.u32 2, %s24
        %p211 = scmp.lt.s32.totalorder %s210, 1
        %s212 = scalar_select %p211, %s210, 1
        %s213 = smul.addr %s212, 4
        %s214 = scalar_lea.vmem %s0, %s213
        %s215 = smul.u32 2, %s24
      $region16: #{initial_conv_pallas.2} parent=11 // pred_fallthru
        _
      // Predicated region
      $region17: #{initial_conv_pallas.2} parent=11 // pred_check
        %p216 = pneg %p108
      $region18: #{initial_conv_pallas.2} parent=11 // pred_check_branch
        %218 = sbr.rel (%p216) target = $region20
      $region19: #{initial_conv_pallas.2} parent=11 // pred_region
        _
      $region20: #{initial_conv_pallas.2} parent=11 // pred_fallthru
        _
    $region12: #{initial_conv_pallas.2} parent=5 // pred_fallthru
      _
    %p219 = scmp.lt.s32.totalorder %s12, 2
    // Predicated region
    $region21: #{initial_conv_pallas.2} parent=5 // pred_check
      %p220 = pneg %p219
    $region22: #{initial_conv_pallas.2} parent=5 // pred_check_branch
      %222 = sbr.rel (%p220) target = $region24
    $region23: #{initial_conv_pallas.2} parent=5 // pred_region
      // Predicated region
      $region25: #{initial_conv_pallas.2} parent=23 // pred_check
        %p223 = pneg %p81
      $region26: #{initial_conv_pallas.2} parent=23 // pred_check_branch
        %225 = sbr.rel (%p223) target = $region28
      $region27: #{initial_conv_pallas.2} parent=23 // pred_region
        %s226 = smul.u32 32, %s21
        %s227 = smul.u32 2, %s20
        %p228 = scmp.lt.s32.totalorder %s19, 1
        %s229 = scalar_select %p228, %s19, 1
        %p230 = scmp.lt.s32.totalorder %s226, 31
        %s231 = scalar_select %p230, %s226, 31
        %p232 = scmp.lt.s32.totalorder %s227, 1
        %s233 = scalar_select %p232, %s227, 1
        %s234 = smul.addr %s231, 2
        %s235 = sadd.s32 %s233, %s234
        %s236 = smul.addr %s229, 64
        %s237 = sadd.s32 %s235, %s236
        %s238 = smul.addr %s237, 4
        %s239 = scalar_lea.vmem %s1, %s238
        %s240 = smul.u32 32, %s21
        %s241 = smul.u32 2, %s20
      $region28: #{initial_conv_pallas.2} parent=23 // pred_fallthru
        _
    $region24: #{initial_conv_pallas.2} parent=5 // pred_fallthru
      _
    %p242 = scmp.le.s32.totalorder 1, %s12
    %p243 = scmp.lt.s32.totalorder %s12, 3
    %p244 = pnand %p242, %p243
    %p245 = pneg %p244
    // Predicated region
    $region29: #{initial_conv_pallas.2} parent=5 // pred_check
      _
    $region30: #{initial_conv_pallas.2} parent=5 // pred_check_branch
      %247 = sbr.rel (%p244) target = $region32
    $region31: #{initial_conv_pallas.2} parent=5 // pred_region
      %s248 = ssub.s32 %s12, 1
      %s249 = smul.u32 2, %s24
      %p250 = scmp.lt.s32.totalorder %s249, 1
      %s251 = scalar_select %p250, %s249, 1
      %s252 = smul.addr %s251, 4
      %s253 = scalar_lea.vmem %s0, %s252
      %p254 = pneg %p57
      %p255 = pneg %p54
      %s256 = smul.u32 32, %s24
      %s257 = smul.u32 2, %s23
      %p258 = scmp.lt.s32.totalorder %s22, 1
      %s259 = scalar_select %p258, %s22, 1
      %p260 = scmp.lt.s32.totalorder %s256, 31
      %s261 = scalar_select %p260, %s256, 31
      %p262 = scmp.lt.s32.totalorder %s257, 1
      %s263 = scalar_select %p262, %s257, 1
      %s264 = smul.addr %s261, 2
      %s265 = sadd.s32 %s263, %s264
      %s266 = smul.addr %s259, 64
      %s267 = sadd.s32 %s265, %s266
      %s268 = smul.addr %s267, 4
      %s269 = scalar_lea.vmem %s1, %s268
      %p270 = pneg %p87
      %p271 = pneg %p84
      %p272 = pneg %p108
      %p273 = pneg %p105
      %p274 = pneg %p136
      %p275 = pneg %p133
      %s276 = smul.u32 2, %s23
      %p277 = scmp.lt.s32.totalorder %s22, 1
      %s278 = scalar_select %p277, %s22, 1
      %p279 = scmp.lt.s32.totalorder %s276, 1
      %s280 = scalar_select %p279, %s276, 1
      %s281 = smul.addr %s278, 16
      %s282 = sadd.s32 %s280, %s281
      %s283 = smul.addr %s282, 8
      %s284 = scalar_lea.vmem %s3, %s283
      %p285 = pneg %p164
      %p286 = pneg %p161
      %p287 = scmp.lt.s32.totalorder %s22, 1
      %s288 = scalar_select %p287, %s22, 1
      %p289 = scmp.lt.s32.totalorder %s23, 0
      %s290 = scalar_select %p289, %s23, 0
      %s291 = smul.addr %s290, 8
      %s292 = smul.addr %s288, 8
      %s293 = sadd.s32 %s291, %s292
      %s294 = smul.addr %s293, 8
      %s295 = scalar_lea.vmem %s4, %s294
      %p296 = pneg %p192
      %p297 = pneg %p189
      %p298 = scmp.lt.s32.totalorder %s22, 1
      %s299 = scalar_select %p298, %s22, 1
      %p300 = scmp.lt.s32.totalorder %s23, 0
      %s301 = scalar_select %p300, %s23, 0
      %s302 = smul.addr %s301, 8
      %s303 = smul.addr %s299, 8
      %s304 = sadd.s32 %s302, %s303
      %s305 = smul.addr %s304, 8
      %s306 = scalar_lea.vmem %s5, %s305
      %s307 = smul.u32 2, %s24
      %p308 = scmp.lt.s32.totalorder %s307, 1
      %s309 = scalar_select %p308, %s307, 1
      %s310 = smul.addr %s309, 4
      %s311 = scalar_lea.vmem %s0, %s310
      %s312 = smul.u32 2, %s24
      %s313 = smul.u32 32, %s24
      %s314 = smul.u32 2, %s23
      %p315 = scmp.lt.s32.totalorder %s22, 1
      %s316 = scalar_select %p315, %s22, 1
      %p317 = scmp.lt.s32.totalorder %s313, 31
      %s318 = scalar_select %p317, %s313, 31
      %p319 = scmp.lt.s32.totalorder %s314, 1
      %s320 = scalar_select %p319, %s314, 1
      %s321 = smul.addr %s318, 2
      %s322 = sadd.s32 %s320, %s321
      %s323 = smul.addr %s316, 64
      %s324 = sadd.s32 %s322, %s323
      %s325 = smul.addr %s324, 4
      %s326 = scalar_lea.vmem %s1, %s325
      %s327 = smul.u32 32, %s24
      %s328 = smul.u32 2, %s23
      %s329 = smul.u32 2, %s23
      %p330 = scmp.lt.s32.totalorder %s22, 1
      %s331 = scalar_select %p330, %s22, 1
      %p332 = scmp.lt.s32.totalorder %s329, 1
      %s333 = scalar_select %p332, %s329, 1
      %s334 = smul.addr %s331, 16
      %s335 = sadd.s32 %s333, %s334
      %s336 = smul.addr %s335, 8
      %s337 = scalar_lea.vmem %s3, %s336
      %s338 = smul.u32 2, %s23
      %p339 = scmp.lt.s32.totalorder %s22, 1
      %s340 = scalar_select %p339, %s22, 1
      %p341 = scmp.lt.s32.totalorder %s23, 0
      %s342 = scalar_select %p341, %s23, 0
      %s343 = smul.addr %s342, 8
      %s344 = smul.addr %s340, 8
      %s345 = sadd.s32 %s343, %s344
      %s346 = smul.addr %s345, 8
      %s347 = scalar_lea.vmem %s4, %s346
      %p348 = scmp.lt.s32.totalorder %s22, 1
      %s349 = scalar_select %p348, %s22, 1
      %p350 = scmp.lt.s32.totalorder %s23, 0
      %s351 = scalar_select %p350, %s23, 0
      %s352 = smul.addr %s351, 8
      %s353 = smul.addr %s349, 8
      %s354 = sadd.s32 %s352, %s353
      %s355 = smul.addr %s354, 8
      %s356 = scalar_lea.vmem %s5, %s355
      %p357 = scmp.eq.s32.totalorder %s24, 0
      // Predicated region
      $region33: #{initial_conv_pallas.2} parent=31 // pred_check
        %p358 = pneg %p357
      $region34: #{initial_conv_pallas.2} parent=31 // pred_check_branch
        %360 = sbr.rel (%p358) target = $region36
      $region35: #{initial_conv_pallas.2} parent=31 // pred_region
        %v361 = vld [vmem:[%s2] sm:$0xff]
        %v362 = vld [vmem:[%s2 + $0x8] sm:$0xff]
        %v363 = vld [vmem:[%s2 + $0x10] sm:$0xff]
        %v364 = vld [vmem:[%s2 + $0x18] sm:$0xff]
        %v365 = vld [vmem:[%s2 + $0x20] sm:$0xff]
        %v366 = vld [vmem:[%s2 + $0x28] sm:$0xff]
        %v367 = vld [vmem:[%s2 + $0x30] sm:$0xff]
        %v368 = vld [vmem:[%s2 + $0x38] sm:$0xff]
        %370 = vset.pattern.permute.xlu0 0
        %371 = vperm.xlu0 %370, %v361
        %v372 = vpop.permute.xlu0 %371
        %375 = vset.pattern.permute.xlu0 0
        %376 = vperm.xlu0 %375, %v362
        %v377 = vpop.permute.xlu0 %376
        %380 = vset.pattern.permute.xlu0 0
        %381 = vperm.xlu0 %380, %v363
        %v382 = vpop.permute.xlu0 %381
        %385 = vset.pattern.permute.xlu0 0
        %386 = vperm.xlu0 %385, %v364
        %v387 = vpop.permute.xlu0 %386
        %390 = vset.pattern.permute.xlu0 0
        %391 = vperm.xlu0 %390, %v365
        %v392 = vpop.permute.xlu0 %391
        %395 = vset.pattern.permute.xlu0 0
        %396 = vperm.xlu0 %395, %v366
        %v397 = vpop.permute.xlu0 %396
        %400 = vset.pattern.permute.xlu0 0
        %401 = vperm.xlu0 %400, %v367
        %v402 = vpop.permute.xlu0 %401
        %405 = vset.pattern.permute.xlu0 0
        %406 = vperm.xlu0 %405, %v368
        %v407 = vpop.permute.xlu0 %406
        %409 = vst [vmem:[%s337] sm:$0xff] %v372
        %410 = vst [vmem:[%s337 + $0x8] sm:$0xff] %v372
        %411 = vst [vmem:[%s337 + $0x10] sm:$0xff] %v377
        %412 = vst [vmem:[%s337 + $0x18] sm:$0xff] %v377
        %413 = vst [vmem:[%s337 + $0x20] sm:$0xff] %v382
        %414 = vst [vmem:[%s337 + $0x28] sm:$0xff] %v382
        %415 = vst [vmem:[%s337 + $0x30] sm:$0xff] %v387
        %416 = vst [vmem:[%s337 + $0x38] sm:$0xff] %v387
        %417 = vst [vmem:[%s337 + $0x40] sm:$0xff] %v392
        %418 = vst [vmem:[%s337 + $0x48] sm:$0xff] %v392
        %419 = vst [vmem:[%s337 + $0x50] sm:$0xff] %v397
        %420 = vst [vmem:[%s337 + $0x58] sm:$0xff] %v397
        %421 = vst [vmem:[%s337 + $0x60] sm:$0xff] %v402
        %422 = vst [vmem:[%s337 + $0x68] sm:$0xff] %v402
        %423 = vst [vmem:[%s337 + $0x70] sm:$0xff] %v407
        %424 = vst [vmem:[%s337 + $0x78] sm:$0xff] %v407
      $region36: #{initial_conv_pallas.2} parent=31 // pred_fallthru
        _
      %v425 = vld [vmem:[%s337] sm:$0xff]
      %v426 = vld [vmem:[%s337 + $0x8] sm:$0xff]
      %v427 = vld [vmem:[%s337 + $0x10] sm:$0xff]
      %v428 = vld [vmem:[%s337 + $0x18] sm:$0xff]
      %v429 = vld [vmem:[%s337 + $0x20] sm:$0xff]
      %v430 = vld [vmem:[%s337 + $0x28] sm:$0xff]
      %v431 = vld [vmem:[%s337 + $0x30] sm:$0xff]
      %v432 = vld [vmem:[%s337 + $0x38] sm:$0xff]
      %v433 = vld [vmem:[%s337 + $0x40] sm:$0xff]
      %v434 = vld [vmem:[%s337 + $0x48] sm:$0xff]
      %v435 = vld [vmem:[%s337 + $0x50] sm:$0xff]
      %v436 = vld [vmem:[%s337 + $0x58] sm:$0xff]
      %v437 = vld [vmem:[%s337 + $0x60] sm:$0xff]
      %v438 = vld [vmem:[%s337 + $0x68] sm:$0xff]
      %v439 = vld [vmem:[%s337 + $0x70] sm:$0xff]
      %v440 = vld [vmem:[%s337 + $0x78] sm:$0xff]
      %v441 = vld [vmem:[%s311] sm:$0xff]
      %v442 = vld [vmem:[%s311 + $0x8] sm:$0xff]
      %v443 = vld [vmem:[%s311 + $0x10] sm:$0xff]
      %v444 = vld [vmem:[%s311 + $0x18] sm:$0xff]
      %v445 = vld [vmem:[%s311 + $0x20] sm:$0xff]
      %v446 = vld [vmem:[%s311 + $0x28] sm:$0xff]
      %v447 = vld [vmem:[%s311 + $0x30] sm:$0xff]
      %v448 = vld [vmem:[%s311 + $0x38] sm:$0xff]
      %v449 = vld [vmem:[%s326] sm:$0xff]
      %v450 = vld [vmem:[%s326 + $0x8] sm:$0xff]
      %v451 = vld [vmem:[%s326 + $0x10] sm:$0xff]
      %v452 = vld [vmem:[%s326 + $0x18] sm:$0xff]
      %v453 = vld [vmem:[%s326 + $0x20] sm:$0xff]
      %v454 = vld [vmem:[%s326 + $0x28] sm:$0xff]
      %v455 = vld [vmem:[%s326 + $0x30] sm:$0xff]
      %v456 = vld [vmem:[%s326 + $0x38] sm:$0xff]
      %v457 = vld [vmem:[%s326 + $0x40] sm:$0xff]
      %v458 = vld [vmem:[%s326 + $0x48] sm:$0xff]
      %v459 = vld [vmem:[%s326 + $0x50] sm:$0xff]
      %v460 = vld [vmem:[%s326 + $0x58] sm:$0xff]
      %v461 = vld [vmem:[%s326 + $0x60] sm:$0xff]
      %v462 = vld [vmem:[%s326 + $0x68] sm:$0xff]
      %v463 = vld [vmem:[%s326 + $0x70] sm:$0xff]
      %v464 = vld [vmem:[%s326 + $0x78] sm:$0xff]
      %v465 = vld [vmem:[%s326 + $0x80] sm:$0xff]
      %v466 = vld [vmem:[%s326 + $0x88] sm:$0xff]
      %v467 = vld [vmem:[%s326 + $0x90] sm:$0xff]
      %v468 = vld [vmem:[%s326 + $0x98] sm:$0xff]
      %v469 = vld [vmem:[%s326 + $0xa0] sm:$0xff]
      %v470 = vld [vmem:[%s326 + $0xa8] sm:$0xff]
      %v471 = vld [vmem:[%s326 + $0xb0] sm:$0xff]
      %v472 = vld [vmem:[%s326 + $0xb8] sm:$0xff]
      %v473 = vld [vmem:[%s326 + $0xc0] sm:$0xff]
      %v474 = vld [vmem:[%s326 + $0xc8] sm:$0xff]
      %v475 = vld [vmem:[%s326 + $0xd0] sm:$0xff]
      %v476 = vld [vmem:[%s326 + $0xd8] sm:$0xff]
      %v477 = vld [vmem:[%s326 + $0xe0] sm:$0xff]
      %v478 = vld [vmem:[%s326 + $0xe8] sm:$0xff]
      %v479 = vld [vmem:[%s326 + $0xf0] sm:$0xff]
      %v480 = vld [vmem:[%s326 + $0xf8] sm:$0xff]
      %v489 = vunpack.c.l.b16 %v441
      %v490 = vunpack.c.h.b16 %v441
      %v491 = vunpack.c.l.b16 %v442
      %v492 = vunpack.c.h.b16 %v442
      %v493 = vunpack.c.l.b16 %v443
      %v494 = vunpack.c.h.b16 %v443
      %v495 = vunpack.c.l.b16 %v444
      %v496 = vunpack.c.h.b16 %v444
      %v497 = vunpack.c.l.b16 %v445
      %v498 = vunpack.c.h.b16 %v445
      %v499 = vunpack.c.l.b16 %v446
      %v500 = vunpack.c.h.b16 %v446
      %v501 = vunpack.c.l.b16 %v447
      %v502 = vunpack.c.h.b16 %v447
      %v503 = vunpack.c.l.b16 %v448
      %v504 = vunpack.c.h.b16 %v448
      %v505 = vpack.c.b16 %v491, %v489
      %v506 = vpack.c.b16 %v492, %v490
      %v507 = vpack.c.b16 %v495, %v493
      %v508 = vpack.c.b16 %v496, %v494
      %v509 = vpack.c.b16 %v499, %v497
      %v510 = vpack.c.b16 %v500, %v498
      %v511 = vpack.c.b16 %v503, %v501
      %v512 = vpack.c.b16 %v504, %v502
      %v553 = vunpack.c.l.b16 %v449
      %v554 = vunpack.c.h.b16 %v449
      %v555 = vunpack.c.l.b16 %v450
      %v556 = vunpack.c.h.b16 %v450
      %v557 = vunpack.c.l.b16 %v451
      %v558 = vunpack.c.h.b16 %v451
      %v559 = vunpack.c.l.b16 %v452
      %v560 = vunpack.c.h.b16 %v452
      %v561 = vunpack.c.l.b16 %v453
      %v562 = vunpack.c.h.b16 %v453
      %v563 = vunpack.c.l.b16 %v454
      %v564 = vunpack.c.h.b16 %v454
      %v565 = vunpack.c.l.b16 %v455
      %v566 = vunpack.c.h.b16 %v455
      %v567 = vunpack.c.l.b16 %v456
      %v568 = vunpack.c.h.b16 %v456
      %v569 = vunpack.c.l.b16 %v457
      %v570 = vunpack.c.h.b16 %v457
      %v571 = vunpack.c.l.b16 %v458
      %v572 = vunpack.c.h.b16 %v458
      %v573 = vunpack.c.l.b16 %v459
      %v574 = vunpack.c.h.b16 %v459
      %v575 = vunpack.c.l.b16 %v460
      %v576 = vunpack.c.h.b16 %v460
      %v577 = vunpack.c.l.b16 %v461
      %v578 = vunpack.c.h.b16 %v461
      %v579 = vunpack.c.l.b16 %v462
      %v580 = vunpack.c.h.b16 %v462
      %v581 = vunpack.c.l.b16 %v463
      %v582 = vunpack.c.h.b16 %v463
      %v583 = vunpack.c.l.b16 %v464
      %v584 = vunpack.c.h.b16 %v464
      %v585 = vunpack.c.l.b16 %v465
      %v586 = vunpack.c.h.b16 %v465
      %v587 = vunpack.c.l.b16 %v466
      %v588 = vunpack.c.h.b16 %v466
      %v589 = vunpack.c.l.b16 %v467
      %v590 = vunpack.c.h.b16 %v467
      %v591 = vunpack.c.l.b16 %v468
      %v592 = vunpack.c.h.b16 %v468
      %v593 = vunpack.c.l.b16 %v469
      %v594 = vunpack.c.h.b16 %v469
      %v595 = vunpack.c.l.b16 %v470
      %v596 = vunpack.c.h.b16 %v470
      %v597 = vunpack.c.l.b16 %v471
      %v598 = vunpack.c.h.b16 %v471
      %v599 = vunpack.c.l.b16 %v472
      %v600 = vunpack.c.h.b16 %v472
      %v601 = vunpack.c.l.b16 %v473
      %v602 = vunpack.c.h.b16 %v473
      %v603 = vunpack.c.l.b16 %v474
      %v604 = vunpack.c.h.b16 %v474
      %v605 = vunpack.c.l.b16 %v475
      %v606 = vunpack.c.h.b16 %v475
      %v607 = vunpack.c.l.b16 %v476
      %v608 = vunpack.c.h.b16 %v476
      %v609 = vunpack.c.l.b16 %v477
      %v610 = vunpack.c.h.b16 %v477
      %v611 = vunpack.c.l.b16 %v478
      %v612 = vunpack.c.h.b16 %v478
      %v613 = vunpack.c.l.b16 %v479
      %v614 = vunpack.c.h.b16 %v479
      %v615 = vunpack.c.l.b16 %v480
      %v616 = vunpack.c.h.b16 %v480
      %v617 = vpack.c.b16 %v555, %v553
      %v618 = vpack.c.b16 %v556, %v554
      %v619 = vpack.c.b16 %v559, %v557
      %v620 = vpack.c.b16 %v560, %v558
      %v621 = vpack.c.b16 %v563, %v561
      %v622 = vpack.c.b16 %v564, %v562
      %v623 = vpack.c.b16 %v567, %v565
      %v624 = vpack.c.b16 %v568, %v566
      %v625 = vpack.c.b16 %v571, %v569
      %v626 = vpack.c.b16 %v572, %v570
      %v627 = vpack.c.b16 %v575, %v573
      %v628 = vpack.c.b16 %v576, %v574
      %v629 = vpack.c.b16 %v579, %v577
      %v630 = vpack.c.b16 %v580, %v578
      %v631 = vpack.c.b16 %v583, %v581
      %v632 = vpack.c.b16 %v584, %v582
      %v633 = vpack.c.b16 %v587, %v585
      %v634 = vpack.c.b16 %v588, %v586
      %v635 = vpack.c.b16 %v591, %v589
      %v636 = vpack.c.b16 %v592, %v590
      %v637 = vpack.c.b16 %v595, %v593
      %v638 = vpack.c.b16 %v596, %v594
      %v639 = vpack.c.b16 %v599, %v597
      %v640 = vpack.c.b16 %v600, %v598
      %v641 = vpack.c.b16 %v603, %v601
      %v642 = vpack.c.b16 %v604, %v602
      %v643 = vpack.c.b16 %v607, %v605
      %v644 = vpack.c.b16 %v608, %v606
      %v645 = vpack.c.b16 %v611, %v609
      %v646 = vpack.c.b16 %v612, %v610
      %v647 = vpack.c.b16 %v615, %v613
      %v648 = vpack.c.b16 %v616, %v614
      %681 = vmatprep.subr.bf16.mxu0 %v618
      %682 = vmatpush1.bf16.msra.mxu0 %v617
      %683 = vmatprep.subr.bf16.mxu0 %v620
      %684 = vmatpush1.bf16.msra.mxu0 %v619
      %685 = vmatprep.subr.bf16.mxu0 %v622
      %686 = vmatpush1.bf16.msra.mxu0 %v621
      %687 = vmatprep.subr.bf16.mxu0 %v624
      %688 = vmatpush1.bf16.msra.mxu0 %v623
      %689 = vmatprep.subr.bf16.mxu0 %v626
      %690 = vmatpush1.bf16.msra.mxu0 %v625
      %691 = vmatprep.subr.bf16.mxu0 %v628
      %692 = vmatpush1.bf16.msra.mxu0 %v627
      %693 = vmatprep.subr.bf16.mxu0 %v630
      %694 = vmatpush1.bf16.msra.mxu0 %v629
      %695 = vmatprep.subr.bf16.mxu0 %v632
      %696 = vmatpush1.bf16.msra.mxu0 %v631
      %697 = vmatprep.subr.bf16.mxu0 %v634
      %698 = vmatpush1.bf16.msra.mxu0 %v633
      %699 = vmatprep.subr.bf16.mxu0 %v636
      %700 = vmatpush1.bf16.msra.mxu0 %v635
      %701 = vmatprep.subr.bf16.mxu0 %v638
      %702 = vmatpush1.bf16.msra.mxu0 %v637
      %703 = vmatprep.subr.bf16.mxu0 %v640
      %704 = vmatpush1.bf16.msra.mxu0 %v639
      %705 = vmatprep.subr.bf16.mxu0 %v642
      %706 = vmatpush1.bf16.msra.mxu0 %v641
      %707 = vmatprep.subr.bf16.mxu0 %v644
      %708 = vmatpush1.bf16.msra.mxu0 %v643
      %709 = vmatprep.subr.bf16.mxu0 %v646
      %710 = vmatpush1.bf16.msra.mxu0 %v645
      %711 = vmatprep.subr.bf16.mxu0 %v648
      %712 = vmatpush1.bf16.msra.mxu0 %v647
      %713 = vmatprep.mubr.bf16.mxu0 %v506
      %714 = vmatmul.mubr.bf16.gmra.mrb[0].mxu0 %v505
      %v715 = vpop.f32.mrb[0].mxu0
      %v716 = vadd.f32 0.0, %v715
      %v717 = vpop.f32.mrb[0].mxu0
      %v718 = vadd.f32 0.0, %v717
      %v719 = vpop.f32.mrb[0].mxu0
      %v720 = vadd.f32 0.0, %v719
      %v721 = vpop.f32.mrb[0].mxu0
      %v722 = vadd.f32 0.0, %v721
      %723 = vmatprep.mubr.bf16.mxu0 %v508
      %724 = vmatmul.mubr.bf16.gmra.mrb[0].mxu0 %v507
      %v725 = vpop.f32.mrb[0].mxu0
      %v726 = vadd.f32 0.0, %v725
      %v727 = vpop.f32.mrb[0].mxu0
      %v728 = vadd.f32 0.0, %v727
      %v729 = vpop.f32.mrb[0].mxu0
      %v730 = vadd.f32 0.0, %v729
      %v731 = vpop.f32.mrb[0].mxu0
      %v732 = vadd.f32 0.0, %v731
      %733 = vmatprep.mubr.bf16.mxu0 %v510
      %734 = vmatmul.mubr.bf16.gmra.mrb[0].mxu0 %v509
      %v735 = vpop.f32.mrb[0].mxu0
      %v736 = vadd.f32 0.0, %v735
      %v737 = vpop.f32.mrb[0].mxu0
      %v738 = vadd.f32 0.0, %v737
      %v739 = vpop.f32.mrb[0].mxu0
      %v740 = vadd.f32 0.0, %v739
      %v741 = vpop.f32.mrb[0].mxu0
      %v742 = vadd.f32 0.0, %v741
      %743 = vmatprep.mubr.bf16.mxu0 %v512
      %744 = vmatmul.mubr.bf16.gmra.mrb[0].mxu0 %v511
      %v745 = vpop.f32.mrb[0].mxu0
      %v746 = vadd.f32 0.0, %v745
      %v747 = vpop.f32.mrb[0].mxu0
      %v748 = vadd.f32 0.0, %v747
      %v749 = vpop.f32.mrb[0].mxu0
      %v750 = vadd.f32 0.0, %v749
      %v751 = vpop.f32.mrb[0].mxu0
      %v752 = vadd.f32 0.0, %v751
      %753 = vdwg.mxu0
      %v754 = vadd.f32 %v425, %v716
      %v755 = vadd.f32 %v426, %v718
      %v756 = vadd.f32 %v427, %v720
      %v757 = vadd.f32 %v428, %v722
      %v758 = vadd.f32 %v429, %v726
      %v759 = vadd.f32 %v430, %v728
      %v760 = vadd.f32 %v431, %v730
      %v761 = vadd.f32 %v432, %v732
      %v762 = vadd.f32 %v433, %v736
      %v763 = vadd.f32 %v434, %v738
      %v764 = vadd.f32 %v435, %v740
      %v765 = vadd.f32 %v436, %v742
      %v766 = vadd.f32 %v437, %v746
      %v767 = vadd.f32 %v438, %v748
      %v768 = vadd.f32 %v439, %v750
      %v769 = vadd.f32 %v440, %v752
      %770 = vst [vmem:[%s337] sm:$0xff] %v754
      %771 = vst [vmem:[%s337 + $0x8] sm:$0xff] %v755
      %772 = vst [vmem:[%s337 + $0x10] sm:$0xff] %v756
      %773 = vst [vmem:[%s337 + $0x18] sm:$0xff] %v757
      %774 = vst [vmem:[%s337 + $0x20] sm:$0xff] %v758
      %775 = vst [vmem:[%s337 + $0x28] sm:$0xff] %v759
      %776 = vst [vmem:[%s337 + $0x30] sm:$0xff] %v760
      %777 = vst [vmem:[%s337 + $0x38] sm:$0xff] %v761
      %778 = vst [vmem:[%s337 + $0x40] sm:$0xff] %v762
      %779 = vst [vmem:[%s337 + $0x48] sm:$0xff] %v763
      %780 = vst [vmem:[%s337 + $0x50] sm:$0xff] %v764
      %781 = vst [vmem:[%s337 + $0x58] sm:$0xff] %v765
      %782 = vst [vmem:[%s337 + $0x60] sm:$0xff] %v766
      %783 = vst [vmem:[%s337 + $0x68] sm:$0xff] %v767
      %784 = vst [vmem:[%s337 + $0x70] sm:$0xff] %v768
      %785 = vst [vmem:[%s337 + $0x78] sm:$0xff] %v769
      // Predicated region
      $region37: #{initial_conv_pallas.2} parent=31 // pred_check
        %p786 = pneg %p357
      $region38: #{initial_conv_pallas.2} parent=31 // pred_check_branch
        %788 = sbr.rel (%p786) target = $region40
      $region39: #{initial_conv_pallas.2} parent=31 // pred_region
        %v789 = vld [vmem:[%s337] sm:$0xff]
        %v790 = vld [vmem:[%s337 + $0x8] sm:$0xff]
        %v791 = vld [vmem:[%s337 + $0x10] sm:$0xff]
        %v792 = vld [vmem:[%s337 + $0x18] sm:$0xff]
        %v793 = vld [vmem:[%s337 + $0x20] sm:$0xff]
        %v794 = vld [vmem:[%s337 + $0x28] sm:$0xff]
        %v795 = vld [vmem:[%s337 + $0x30] sm:$0xff]
        %v796 = vld [vmem:[%s337 + $0x38] sm:$0xff]
        %v797 = vld [vmem:[%s337 + $0x40] sm:$0xff]
        %v798 = vld [vmem:[%s337 + $0x48] sm:$0xff]
        %v799 = vld [vmem:[%s337 + $0x50] sm:$0xff]
        %v800 = vld [vmem:[%s337 + $0x58] sm:$0xff]
        %v801 = vld [vmem:[%s337 + $0x60] sm:$0xff]
        %v802 = vld [vmem:[%s337 + $0x68] sm:$0xff]
        %v803 = vld [vmem:[%s337 + $0x70] sm:$0xff]
        %v804 = vld [vmem:[%s337 + $0x78] sm:$0xff]
        %v805 = vadd.f32 %v789, %v790
        %806 = vadd.xlane.f32.xlu0 %v805
        %v807 = vpop.xlane.xlu0 %806
        %v808 = vadd.f32 %v791, %v792
        %809 = vadd.xlane.f32.xlu0 %v808
        %v810 = vpop.xlane.xlu0 %809
        %v811 = vadd.f32 %v793, %v794
        %812 = vadd.xlane.f32.xlu0 %v811
        %v813 = vpop.xlane.xlu0 %812
        %v814 = vadd.f32 %v795, %v796
        %815 = vadd.xlane.f32.xlu0 %v814
        %v816 = vpop.xlane.xlu0 %815
        %v817 = vadd.f32 %v797, %v798
        %818 = vadd.xlane.f32.xlu0 %v817
        %v819 = vpop.xlane.xlu0 %818
        %v820 = vadd.f32 %v799, %v800
        %821 = vadd.xlane.f32.xlu0 %v820
        %v822 = vpop.xlane.xlu0 %821
        %v823 = vadd.f32 %v801, %v802
        %824 = vadd.xlane.f32.xlu0 %v823
        %v825 = vpop.xlane.xlu0 %824
        %v826 = vadd.f32 %v803, %v804
        %827 = vadd.xlane.f32.xlu0 %v826
        %v828 = vpop.xlane.xlu0 %827
        %vm829 = vcmask 7168
        %830 = vst.msk [vmem:[%s347] sm:$0xff] %vm829, %v807
        %831 = vst.msk [vmem:[%s347 + $0x8] sm:$0xff] %vm829, %v810
        %832 = vst.msk [vmem:[%s347 + $0x10] sm:$0xff] %vm829, %v813
        %833 = vst.msk [vmem:[%s347 + $0x18] sm:$0xff] %vm829, %v816
        %834 = vst.msk [vmem:[%s347 + $0x20] sm:$0xff] %vm829, %v819
        %835 = vst.msk [vmem:[%s347 + $0x28] sm:$0xff] %vm829, %v822
        %836 = vst.msk [vmem:[%s347 + $0x30] sm:$0xff] %vm829, %v825
        %837 = vst.msk [vmem:[%s347 + $0x38] sm:$0xff] %vm829, %v828
        %v838 = vmul.f32 %v789, %v789
        %v839 = vmul.f32 %v790, %v790
        %v840 = vmul.f32 %v791, %v791
        %v841 = vmul.f32 %v792, %v792
        %v842 = vmul.f32 %v793, %v793
        %v843 = vmul.f32 %v794, %v794
        %v844 = vmul.f32 %v795, %v795
        %v845 = vmul.f32 %v796, %v796
        %v846 = vmul.f32 %v797, %v797
        %v847 = vmul.f32 %v798, %v798
        %v848 = vmul.f32 %v799, %v799
        %v849 = vmul.f32 %v800, %v800
        %v850 = vmul.f32 %v801, %v801
        %v851 = vmul.f32 %v802, %v802
        %v852 = vmul.f32 %v803, %v803
        %v853 = vmul.f32 %v804, %v804
        %v854 = vadd.f32 %v838, %v839
        %855 = vadd.xlane.f32.xlu0 %v854
        %v856 = vpop.xlane.xlu0 %855
        %v857 = vadd.f32 %v840, %v841
        %858 = vadd.xlane.f32.xlu0 %v857
        %v859 = vpop.xlane.xlu0 %858
        %v860 = vadd.f32 %v842, %v843
        %861 = vadd.xlane.f32.xlu0 %v860
        %v862 = vpop.xlane.xlu0 %861
        %v863 = vadd.f32 %v844, %v845
        %864 = vadd.xlane.f32.xlu0 %v863
        %v865 = vpop.xlane.xlu0 %864
        %v866 = vadd.f32 %v846, %v847
        %867 = vadd.xlane.f32.xlu0 %v866
        %v868 = vpop.xlane.xlu0 %867
        %v869 = vadd.f32 %v848, %v849
        %870 = vadd.xlane.f32.xlu0 %v869
        %v871 = vpop.xlane.xlu0 %870
        %v872 = vadd.f32 %v850, %v851
        %873 = vadd.xlane.f32.xlu0 %v872
        %v874 = vpop.xlane.xlu0 %873
        %v875 = vadd.f32 %v852, %v853
        %876 = vadd.xlane.f32.xlu0 %v875
        %v877 = vpop.xlane.xlu0 %876
        %878 = vst.msk [vmem:[%s356] sm:$0xff] %vm829, %v856
        %879 = vst.msk [vmem:[%s356 + $0x8] sm:$0xff] %vm829, %v859
        %880 = vst.msk [vmem:[%s356 + $0x10] sm:$0xff] %vm829, %v862
        %881 = vst.msk [vmem:[%s356 + $0x18] sm:$0xff] %vm829, %v865
        %882 = vst.msk [vmem:[%s356 + $0x20] sm:$0xff] %vm829, %v868
        %883 = vst.msk [vmem:[%s356 + $0x28] sm:$0xff] %vm829, %v871
        %884 = vst.msk [vmem:[%s356 + $0x30] sm:$0xff] %vm829, %v874
        %885 = vst.msk [vmem:[%s356 + $0x38] sm:$0xff] %vm829, %v877
      $region40: #{initial_conv_pallas.2} parent=31 // pred_fallthru
        _
      %s886 = smul.u32 2, %s23
      %p887 = scmp.lt.s32.totalorder %s22, 1
      %s888 = scalar_select %p887, %s22, 1
      %p889 = scmp.lt.s32.totalorder %s886, 1
      %s890 = scalar_select %p889, %s886, 1
      %s891 = smul.addr %s888, 16
      %s892 = sadd.s32 %s890, %s891
      %s893 = smul.addr %s892, 8
      %s894 = scalar_lea.vmem %s3, %s893
      %p895 = scmp.lt.s32.totalorder %s22, 1
      %s896 = scalar_select %p895, %s22, 1
      %p897 = scmp.lt.s32.totalorder %s23, 0
      %s898 = scalar_select %p897, %s23, 0
      %s899 = smul.addr %s898, 8
      %s900 = smul.addr %s896, 8
      %s901 = sadd.s32 %s899, %s900
      %s902 = smul.addr %s901, 8
      %s903 = scalar_lea.vmem %s4, %s902
      %p904 = scmp.lt.s32.totalorder %s22, 1
      %s905 = scalar_select %p904, %s22, 1
      %p906 = scmp.lt.s32.totalorder %s23, 0
      %s907 = scalar_select %p906, %s23, 0
      %s908 = smul.addr %s907, 8
      %s909 = smul.addr %s905, 8
      %s910 = sadd.s32 %s908, %s909
      %s911 = smul.addr %s910, 8
      %s912 = scalar_lea.vmem %s5, %s911
      // Predicated region
      $region41: #{initial_conv_pallas.2} parent=31 // pred_check
        %p913 = pneg %p133
      $region42: #{initial_conv_pallas.2} parent=31 // pred_check_branch
        %915 = sbr.rel (%p913) target = $region44
      $region43: #{initial_conv_pallas.2} parent=31 // pred_region
        %s916 = smul.u32 2, %s23
      $region44: #{initial_conv_pallas.2} parent=31 // pred_fallthru
        _
      // Predicated region
      $region45: #{initial_conv_pallas.2} parent=31 // pred_check
        %p917 = pneg %p161
      $region46: #{initial_conv_pallas.2} parent=31 // pred_check_branch
        %919 = sbr.rel (%p917) target = $region48
      $region47: #{initial_conv_pallas.2} parent=31 // pred_region
        _
      $region48: #{initial_conv_pallas.2} parent=31 // pred_fallthru
        _
      // Predicated region
      $region49: #{initial_conv_pallas.2} parent=31 // pred_check
        %p920 = pneg %p189
      $region50: #{initial_conv_pallas.2} parent=31 // pred_check_branch
        %922 = sbr.rel (%p920) target = $region52
      $region51: #{initial_conv_pallas.2} parent=31 // pred_region
        _
      $region52: #{initial_conv_pallas.2} parent=31 // pred_fallthru
        _
    $region32: #{initial_conv_pallas.2} parent=5 // pred_fallthru
      _
    %p923 = scmp.le.s32.totalorder 2, %s12
    // Predicated region
    $region53: #{initial_conv_pallas.2} parent=5 // pred_check
      %p924 = pneg %p923
    $region54: #{initial_conv_pallas.2} parent=5 // pred_check_branch
      %926 = sbr.rel (%p924) target = $region56
    $region55: #{initial_conv_pallas.2} parent=5 // pred_region
      %s927 = ssub.s32 %s12, 2
      // Predicated region
      $region57: #{initial_conv_pallas.2} parent=55 // pred_check
        %p928 = pneg %p139
      $region58: #{initial_conv_pallas.2} parent=55 // pred_check_branch
        %930 = sbr.rel (%p928) target = $region60
      $region59: #{initial_conv_pallas.2} parent=55 // pred_region
        %s931 = smul.u32 2, %s26
        %p932 = scmp.lt.s32.totalorder %s25, 1
        %s933 = scalar_select %p932, %s25, 1
        %p934 = scmp.lt.s32.totalorder %s931, 1
        %s935 = scalar_select %p934, %s931, 1
        %s936 = smul.addr %s933, 16
        %s937 = sadd.s32 %s935, %s936
        %s938 = smul.addr %s937, 8
        %s939 = scalar_lea.vmem %s3, %s938
      $region60: #{initial_conv_pallas.2} parent=55 // pred_fallthru
        _
      // Predicated region
      $region61: #{initial_conv_pallas.2} parent=55 // pred_check
        %p940 = pneg %p167
      $region62: #{initial_conv_pallas.2} parent=55 // pred_check_branch
        %942 = sbr.rel (%p940) target = $region64
      $region63: #{initial_conv_pallas.2} parent=55 // pred_region
        %p943 = scmp.lt.s32.totalorder %s25, 1
        %s944 = scalar_select %p943, %s25, 1
        %p945 = scmp.lt.s32.totalorder %s26, 0
        %s946 = scalar_select %p945, %s26, 0
        %s947 = smul.addr %s946, 8
        %s948 = smul.addr %s944, 8
        %s949 = sadd.s32 %s947, %s948
        %s950 = smul.addr %s949, 8
        %s951 = scalar_lea.vmem %s4, %s950
      $region64: #{initial_conv_pallas.2} parent=55 // pred_fallthru
        _
      // Predicated region
      $region65: #{initial_conv_pallas.2} parent=55 // pred_check
        %p952 = pneg %p195
      $region66: #{initial_conv_pallas.2} parent=55 // pred_check_branch
        %954 = sbr.rel (%p952) target = $region68
      $region67: #{initial_conv_pallas.2} parent=55 // pred_region
        %p955 = scmp.lt.s32.totalorder %s25, 1
        %s956 = scalar_select %p955, %s25, 1
        %p957 = scmp.lt.s32.totalorder %s26, 0
        %s958 = scalar_select %p957, %s26, 0
        %s959 = smul.addr %s958, 8
        %s960 = smul.addr %s956, 8
        %s961 = sadd.s32 %s959, %s960
        %s962 = smul.addr %s961, 8
        %s963 = scalar_lea.vmem %s5, %s962
      $region68: #{initial_conv_pallas.2} parent=55 // pred_fallthru
        _
    $region56: #{initial_conv_pallas.2} parent=5 // pred_fallthru
      _
  $region6: #{initial_conv_pallas.2} parent=0 // loop_footer
    %s16 = sadd.s32 1, %s12
  $region7: #{initial_conv_pallas.2} parent=0 // loop_footer_branch
    %11 = sbr.rel target = $region3
  $region8: #{initial_conv_pallas.2} parent=0 // loop_exit
    _

</llo_original>
